<compile_context>
chip_gen: v7x
topology: tpu7x:2x2x1
jax: 0.10.0
libtpu: 0.0.40
codegen_flags: <defaults>
</compile_context>

<pallas_src>
import functools

import jax
import jax.numpy as jnp
from jax.experimental import pallas as pl
from jax.experimental.pallas import tpu as pltpu


def _round_up(x, m):
    return ((x + m - 1) // m) * m


def critic_kernel(x_ref, w1_ref, b1_ref, w2_ref, b2_ref, wo_ref, bo_ref,
                  out_ref, *, vec_out):
    # One batch tile per grid step; weight/bias blocks are identical every step
    # (resident in VMEM). MXU in bf16, accumulation + elementwise in f32.
    x = x_ref[...].astype(jnp.bfloat16)
    h1 = jnp.dot(x, w1_ref[...], preferred_element_type=jnp.float32) + b1_ref[...]
    h1 = jnp.maximum(h1, 0.0)                                   # f32 on the VPU
    h2 = jnp.dot(h1.astype(jnp.bfloat16), w2_ref[...],
                 preferred_element_type=jnp.float32) + b2_ref[...]
    h2 = jnp.maximum(h2, 0.0)
    if vec_out:
        # output_size == 1: lane reduction (VPU/XLU) instead of a 1-column matmul.
        o = jnp.sum(h2 * wo_ref[...], axis=-1, keepdims=True) + bo_ref[...]
    else:
        o = jnp.dot(h2.astype(jnp.bfloat16), wo_ref[...],
                    preferred_element_type=jnp.float32) + bo_ref[...]
    out_ref[...] = o.astype(out_ref.dtype)


def critic_net_forward(x, params, *, tm=None):
    """x: (B, input_size) float32. params: dict of w1,b1,w2,b2,wo,bo (f32)."""
    w1, b1 = params["w1"], params["b1"]
    w2, b2 = params["w2"], params["b2"]
    wo, bo = params["wo"], params["bo"]

    B, in_size = x.shape
    hidden = w1.shape[1]
    out_size = wo.shape[1]
    vec_out = (out_size == 1)

    # Lane-dense hidden dimension (zero padding is numerically exact).
    hp = _round_up(hidden, 128)
    w1p = jnp.zeros((in_size, hp), jnp.bfloat16).at[:, :hidden].set(
        w1.astype(jnp.bfloat16))
    b1p = jnp.zeros((1, hp), jnp.float32).at[:, :hidden].set(b1[None, :])
    w2p = jnp.zeros((hp, hp), jnp.bfloat16).at[:hidden, :hidden].set(
        w2.astype(jnp.bfloat16))
    b2p = jnp.zeros((1, hp), jnp.float32).at[:, :hidden].set(b2[None, :])
    if vec_out:
        # Final layer as a broadcast row for the in-kernel lane reduction (f32).
        wop = jnp.zeros((1, hp), jnp.float32).at[:, :hidden].set(wo[:, 0][None, :])
    else:
        wop = jnp.zeros((hp, out_size), jnp.bfloat16).at[:hidden, :].set(
            wo.astype(jnp.bfloat16))
    bop = bo.reshape(1, out_size).astype(jnp.float32)

    # Batch tile: multiple of 8, grows with batch, capped at 512 rows.
    if tm is None:
        tm = min(512, max(8, _round_up(B, 8)))
    nb = pl.cdiv(B, tm)
    bp = nb * tm
    xp = x if bp == B else jnp.pad(x, ((0, bp - B), (0, 0)))

    resident = lambda shape: pl.BlockSpec(shape, lambda i: (0, 0))

    flops = 2 * bp * (in_size * hp + hp * hp + hp * out_size)
    bytes_accessed = (xp.size * xp.dtype.itemsize
                      + sum(a.size * a.dtype.itemsize
                            for a in (w1p, b1p, w2p, b2p, wop, bop))
                      + bp * out_size * 4)

    out = pl.pallas_call(
        functools.partial(critic_kernel, vec_out=vec_out),
        out_shape=jax.ShapeDtypeStruct((bp, out_size), jnp.float32),
        grid=(nb,),
        in_specs=[
            pl.BlockSpec((tm, in_size), lambda i: (i, 0)),   # streamed batch tiles
            resident(w1p.shape), resident(b1p.shape),        # weights stay in VMEM
            resident(w2p.shape), resident(b2p.shape),
            resident(wop.shape), resident(bop.shape),
        ],
        # NOTE: out last dim == output_size (1) -> masked store; acceptable here.
        # If this ever feeds another Pallas stage, emit a lane-dense slab instead.
        out_specs=pl.BlockSpec((tm, out_size), lambda i: (i, 0)),
        compiler_params=pltpu.CompilerParams(
            dimension_semantics=("parallel",),        # batch axis across TCs (v7x)
            vmem_limit_bytes=32 * 1024 * 1024,        # explicit budget (v7x: 64 MiB phys)
        ),
        cost_estimate=pl.CostEstimate(
            flops=flops, transcendentals=0, bytes_accessed=bytes_accessed),
    )(xp, w1p, b1p, w2p, b2p, wop, bop)

    return out[:B]


def init_params(key, input_size, size_hidden, output_size):
    """Deterministic init mimicking nn.Linear (uniform +/- 1/sqrt(fan_in))."""
    ks = jax.random.split(key, 6)

    def linear(kw, kb, fan_in, fan_out):
        bound = 1.0 / jnp.sqrt(fan_in)
        w = jax.random.uniform(kw, (fan_in, fan_out), jnp.float32, -bound, bound)
        b = jax.random.uniform(kb, (fan_out,), jnp.float32, -bound, bound)
        return w, b

    w1, b1 = linear(ks[0], ks[1], input_size, size_hidden)
    w2, b2 = linear(ks[2], ks[3], size_hidden, size_hidden)
    wo, bo = linear(ks[4], ks[5], size_hidden, output_size)
    return {"w1": w1, "b1": b1, "w2": w2, "b2": b2, "wo": wo, "bo": bo}


def reference_forward(x, p):
    """Pure-JAX reference mirroring the kernel's bf16-weight / f32-accum numerics."""
    bf = lambda a: a.astype(jnp.bfloat16).astype(jnp.float32)
    h1 = jax.nn.relu(jnp.dot(bf(x), bf(p["w1"])) + p["b1"])
    h2 = jax.nn.relu(jnp.dot(bf(h1), bf(p["w2"])) + p["b2"])
    return jnp.dot(h2, p["wo"]) + p["bo"]        # final layer is f32 in the kernel too


if __name__ == "__main__":
    key = jax.random.PRNGKey(0)
    k_x, k_p = jax.random.split(key)

    # Batched critic evaluation: amortizes launch/DMA overhead (perf review #1).
    batch = 1024            # -> tm=512, grid=(2,): exercises the streamed pipeline
    input_size = 16
    size_hidden = 32
    output_size = 1

    x = jax.random.normal(k_x, (batch, input_size), jnp.float32)
    params = init_params(k_p, input_size, size_hidden, output_size)

    forward = jax.jit(critic_net_forward)
    out = jax.block_until_ready(forward(x, params))

    ref = reference_forward(x, params)
    assert out.shape == (batch, output_size)
    assert jnp.allclose(out, ref, atol=1e-4, rtol=1e-4), "mismatch vs reference"

    print("KERNEL_OK")
</pallas_src>

<mosaic_0001>
module attributes {stable_mosaic.version = 11 : i64} {
  func.func @critic_kernel(%arg0: i32, %arg1: memref<512x16xf32, #tpu.memory_space<vmem>>, %arg2: memref<16x128xbf16, #tpu.memory_space<vmem>>, %arg3: memref<1x128xf32, #tpu.memory_space<vmem>>, %arg4: memref<128x128xbf16, #tpu.memory_space<vmem>>, %arg5: memref<1x128xf32, #tpu.memory_space<vmem>>, %arg6: memref<1x128xf32, #tpu.memory_space<vmem>>, %arg7: memref<1x1xf32, #tpu.memory_space<vmem>>, %arg8: memref<512x1xf32, #tpu.memory_space<vmem>>) attributes {dimension_semantics = [#tpu.dimension_semantics<parallel>], iteration_bounds = array<i64: 2>, scalar_prefetch = 0 : i64, scratch_operands = 0 : i64, tpu.core_type = #tpu.core_type<tc>, window_params = [{transform_indices = @transform_0, window_bounds = array<i64: 512, 16>}, {pipeline_mode = #tpu.pipeline_mode<synchronous>, transform_indices = @transform_1, window_bounds = array<i64: 16, 128>}, {pipeline_mode = #tpu.pipeline_mode<synchronous>, transform_indices = @transform_2, window_bounds = array<i64: 1, 128>}, {pipeline_mode = #tpu.pipeline_mode<synchronous>, transform_indices = @transform_3, window_bounds = array<i64: 128, 128>}, {pipeline_mode = #tpu.pipeline_mode<synchronous>, transform_indices = @transform_4, window_bounds = array<i64: 1, 128>}, {pipeline_mode = #tpu.pipeline_mode<synchronous>, transform_indices = @transform_5, window_bounds = array<i64: 1, 128>}, {pipeline_mode = #tpu.pipeline_mode<synchronous>, transform_indices = @transform_6, window_bounds = array<i64: 1, 1>}, {transform_indices = @transform_7, window_bounds = array<i64: 512, 1>}]} {
    %c0 = arith.constant 0 : index
    %c0_0 = arith.constant 0 : index
    %0 = vector.load %arg1[%c0, %c0_0] : memref<512x16xf32, #tpu.memory_space<vmem>>, vector<512x16xf32>
    %1 = arith.truncf %0 : vector<512x16xf32> to vector<512x16xbf16>
    %c0_1 = arith.constant 0 : index
    %c0_2 = arith.constant 0 : index
    %2 = vector.load %arg2[%c0_1, %c0_2] : memref<16x128xbf16, #tpu.memory_space<vmem>>, vector<16x128xbf16>
    %cst = arith.constant dense<0.000000e+00> : vector<512x128xf32>
    %3 = tpu.matmul %1, %2, %cst {dimension_numbers = #tpu.dot_dimension_numbers<[1], [0], [0], [1], [0, 0, 1, 1], [], []>} : vector<512x16xbf16>, vector<16x128xbf16>, vector<512x128xf32> -> vector<512x128xf32>
    %c0_3 = arith.constant 0 : index
    %c0_4 = arith.constant 0 : index
    %4 = vector.load %arg3[%c0_3, %c0_4] : memref<1x128xf32, #tpu.memory_space<vmem>>, vector<1x128xf32>
    %5 = vector.broadcast %4 : vector<1x128xf32> to vector<512x128xf32>
    %6 = arith.addf %3, %5 : vector<512x128xf32>
    %cst_5 = arith.constant 0.000000e+00 : f32
    %7 = vector.broadcast %cst_5 : f32 to vector<512x128xf32>
    %8 = arith.maximumf %6, %7 : vector<512x128xf32>
    %9 = arith.truncf %8 : vector<512x128xf32> to vector<512x128xbf16>
    %c0_6 = arith.constant 0 : index
    %c0_7 = arith.constant 0 : index
    %10 = vector.load %arg4[%c0_6, %c0_7] : memref<128x128xbf16, #tpu.memory_space<vmem>>, vector<128x128xbf16>
    %cst_8 = arith.constant dense<0.000000e+00> : vector<512x128xf32>
    %11 = tpu.matmul %9, %10, %cst_8 {dimension_numbers = #tpu.dot_dimension_numbers<[1], [0], [0], [1], [0, 0, 1, 1], [], []>} : vector<512x128xbf16>, vector<128x128xbf16>, vector<512x128xf32> -> vector<512x128xf32>
    %c0_9 = arith.constant 0 : index
    %c0_10 = arith.constant 0 : index
    %12 = vector.load %arg5[%c0_9, %c0_10] : memref<1x128xf32, #tpu.memory_space<vmem>>, vector<1x128xf32>
    %13 = vector.broadcast %12 : vector<1x128xf32> to vector<512x128xf32>
    %14 = arith.addf %11, %13 : vector<512x128xf32>
    %cst_11 = arith.constant 0.000000e+00 : f32
    %15 = vector.broadcast %cst_11 : f32 to vector<512x128xf32>
    %16 = arith.maximumf %14, %15 : vector<512x128xf32>
    %c0_12 = arith.constant 0 : index
    %c0_13 = arith.constant 0 : index
    %17 = vector.load %arg6[%c0_12, %c0_13] : memref<1x128xf32, #tpu.memory_space<vmem>>, vector<1x128xf32>
    %18 = vector.broadcast %17 : vector<1x128xf32> to vector<512x128xf32>
    %19 = arith.mulf %16, %18 : vector<512x128xf32>
    %cst_14 = arith.constant dense<0.000000e+00> : vector<512xf32>
    %20 = vector.multi_reduction <add>, %19, %cst_14 [1] : vector<512x128xf32> to vector<512xf32>
    %21 = vector.shape_cast %20 : vector<512xf32> to vector<512x1xf32>
    %c0_15 = arith.constant 0 : index
    %c0_16 = arith.constant 0 : index
    %22 = vector.load %arg7[%c0_15, %c0_16] : memref<1x1xf32, #tpu.memory_space<vmem>>, vector<1x1xf32>
    %23 = vector.broadcast %22 : vector<1x1xf32> to vector<512x1xf32>
    %24 = arith.addf %21, %23 : vector<512x1xf32>
    %c0_17 = arith.constant 0 : index
    %c0_18 = arith.constant 0 : index
    %25 = vector.load %arg8[%c0_17, %c0_18] : memref<512x1xf32, #tpu.memory_space<vmem>>, vector<512x1xf32>
    tpu.vector_store %arg8[%c0_17, %c0_18], %24 {strides = array<i32>} : memref<512x1xf32, #tpu.memory_space<vmem>>, vector<512x1xf32>,
    return
  }
  func.func @transform_0(%arg0: i32) -> (i32, i32) {
    %c0_i32 = arith.constant 0 : i32
    %c0_i32_0 = arith.constant 0 : i32
    return %arg0, %c0_i32 : i32, i32
  }
  func.func @transform_1(%arg0: i32) -> (i32, i32) {
    %c0_i32 = arith.constant 0 : i32
    %c0_i32_0 = arith.constant 0 : i32
    %c0_i32_1 = arith.constant 0 : i32
    return %c0_i32, %c0_i32_0 : i32, i32
  }
  func.func @transform_2(%arg0: i32) -> (i32, i32) {
    %c0_i32 = arith.constant 0 : i32
    %c0_i32_0 = arith.constant 0 : i32
    %c0_i32_1 = arith.constant 0 : i32
    return %c0_i32, %c0_i32_0 : i32, i32
  }
  func.func @transform_3(%arg0: i32) -> (i32, i32) {
    %c0_i32 = arith.constant 0 : i32
    %c0_i32_0 = arith.constant 0 : i32
    %c0_i32_1 = arith.constant 0 : i32
    return %c0_i32, %c0_i32_0 : i32, i32
  }
  func.func @transform_4(%arg0: i32) -> (i32, i32) {
    %c0_i32 = arith.constant 0 : i32
    %c0_i32_0 = arith.constant 0 : i32
    %c0_i32_1 = arith.constant 0 : i32
    return %c0_i32, %c0_i32_0 : i32, i32
  }
  func.func @transform_5(%arg0: i32) -> (i32, i32) {
    %c0_i32 = arith.constant 0 : i32
    %c0_i32_0 = arith.constant 0 : i32
    %c0_i32_1 = arith.constant 0 : i32
    return %c0_i32, %c0_i32_0 : i32, i32
  }
  func.func @transform_6(%arg0: i32) -> (i32, i32) {
    %c0_i32 = arith.constant 0 : i32
    %c0_i32_0 = arith.constant 0 : i32
    %c0_i32_1 = arith.constant 0 : i32
    return %c0_i32, %c0_i32_0 : i32, i32
  }
  func.func @transform_7(%arg0: i32) -> (i32, i32) {
    %c0_i32 = arith.constant 0 : i32
    %c0_i32_0 = arith.constant 0 : i32
    return %arg0, %c0_i32 : i32, i32
  }
}

</mosaic_0001>

<llo_original>
// kernel: critic_net_forward.1
$region0: #{critic_net_forward.1}
  #allocation0 [shape = 'u32[]', space=smem, size = 0x4, offset = 0x4, fixed_abs, tag = 'smem constant byte address 0x4 - core index']
  #allocation1 [shape = 'u32[144,128]{1,0:T(1,128)}', space=vmem, size = 0x12000, scoped, tag = 'internal scratch']
  #allocation2 [shape = 'f32[1,1]{1,0:T(1,128)S(1)}', space=vmem, size = 0x200, scoped, tag = 'scoped memory for critic_net_forward.1']
  %s0 = inlined_call_operand.vmem [shape: f32[1024,16], index: 0, kind: input, shape index: {}]
  %s1 = inlined_call_operand.vmem [shape: bf16[16,128], index: 1, kind: input, shape index: {}]
  %s2 = inlined_call_operand.vmem [shape: f32[1,128], index: 2, kind: input, shape index: {}]
  %s3 = inlined_call_operand.vmem [shape: bf16[128,128], index: 3, kind: input, shape index: {}]
  %s4 = inlined_call_operand.vmem [shape: f32[1,128], index: 4, kind: input, shape index: {}]
  %s5 = inlined_call_operand.vmem [shape: f32[1,128], index: 5, kind: input, shape index: {}]
  %s6 = inlined_call_operand.<no memory space> [shape: f32[1,1], index: 6, kind: input, shape index: {}]
  %s7 = inlined_call_operand.vmem [shape: f32[1024,1], index: 7, kind: output, shape index: {}]
  %s8 = sld [smem:[#allocation0]]
  $region61: #{critic_net_forward.1} parent=0
    _
  %s10 = ssub.s32 1, %s8
  %s11 = scalar_select 0, %s10, %s8
  %v12 = vstv %s6
  %13 = vst [vmem:[#allocation2] sm:$0x1] %v12
  loop: start=0, step=1, limit=4
  $region2: #{critic_net_forward.1} parent=0 // loop_pre_header
    _
  $region3: #{critic_net_forward.1} parent=0 // loop_header
    %s15 = sphi 0, %s19
    %p16 = scmp.ge.s32.totalorder %s15, 4
    %s25 = sphi 0, %s27
    %s28 = sphi 0, %s25
    %s29 = sphi 0, %s28
    %s45 = sphi 0, %s29
    %s49 = sphi 0, %s49
    %s51 = sphi 0, %s49
    %s52 = sphi 0, %s51
    %s66 = sphi 0, %s52
    %s70 = sphi 0, %s70
    %s72 = sphi 0, %s70
    %s73 = sphi 0, %s72
    %s87 = sphi 0, %s73
    %s91 = sphi 0, %s91
    %s93 = sphi 0, %s91
    %s94 = sphi 0, %s93
    %s108 = sphi 0, %s94
    %s112 = sphi 0, %s112
    %s114 = sphi 0, %s112
    %s115 = sphi 0, %s114
    %s129 = sphi 0, %s115
    %s133 = sphi 0, %s133
    %s135 = sphi 0, %s133
    %s136 = sphi 0, %s135
    %s150 = sphi 0, %s136
    %s154 = sphi 0, %s154
    %s156 = sphi 0, %s154
    %s157 = sphi 0, %s156
    %s171 = sphi 0, %s157
    %s177 = sphi 0, %s179
    %s180 = sphi 0, %s177
    %s181 = sphi 0, %s180
    %s197 = sphi 0, %s181
  $region4: #{critic_net_forward.1} parent=0 // loop_header_branch
    %18 = sbr.rel (%p16) target = $region8
  $region5: #{critic_net_forward.1} parent=0 // loop_body
    %s20 = ssub.s32 %s15, 1
    %s21 = ssub.s32 %s15, 2
    %s22 = sadd.s32 %s15, 1
    %s23 = ssub.s32 %s15, %s22
    %p24 = scmp.eq.s32.totalorder %s23, 0
    %s26 = sadd.s32 %s25, 1
    %s27 = scalar_select %p24, %s25, %s26
    %p30 = pneg %p24
    %p31 = scmp.eq.s32.totalorder %s15, 1
    %p32 = por %p30, %p31
    %p33 = scmp.ne.s32.totalorder %s25, %s28
    %p34 = scmp.eq.s32.totalorder %s15, 0
    %p35 = por %p33, %p34
    %p36 = scmp.ne.s32.totalorder %s25, %s28
    %p37 = scmp.eq.s32.totalorder %s20, 1
    %p38 = por %p36, %p37
    %p39 = scmp.ne.s32.totalorder %s28, %s29
    %p40 = scmp.eq.s32.totalorder %s20, 0
    %p41 = por %p39, %p40
    %p42 = scmp.ne.s32.totalorder %s28, %s29
    %p43 = scmp.eq.s32.totalorder %s21, 1
    %p44 = por %p42, %p43
    %p46 = scmp.ne.s32.totalorder %s29, %s45
    %p47 = scmp.eq.s32.totalorder %s21, 0
    %p48 = por %p46, %p47
    %s50 = sadd.s32 %s49, 1
    %p53 = scmp.eq.s32.totalorder %s15, 1
    %p54 = scmp.ne.s32.totalorder %s49, %s51
    %p55 = scmp.eq.s32.totalorder %s15, 0
    %p56 = por %p54, %p55
    %p57 = scmp.ne.s32.totalorder %s49, %s51
    %p58 = scmp.eq.s32.totalorder %s20, 1
    %p59 = por %p57, %p58
    %p60 = scmp.ne.s32.totalorder %s51, %s52
    %p61 = scmp.eq.s32.totalorder %s20, 0
    %p62 = por %p60, %p61
    %p63 = scmp.ne.s32.totalorder %s51, %s52
    %p64 = scmp.eq.s32.totalorder %s21, 1
    %p65 = por %p63, %p64
    %p67 = scmp.ne.s32.totalorder %s52, %s66
    %p68 = scmp.eq.s32.totalorder %s21, 0
    %p69 = por %p67, %p68
    %s71 = sadd.s32 %s70, 1
    %p74 = scmp.eq.s32.totalorder %s15, 1
    %p75 = scmp.ne.s32.totalorder %s70, %s72
    %p76 = scmp.eq.s32.totalorder %s15, 0
    %p77 = por %p75, %p76
    %p78 = scmp.ne.s32.totalorder %s70, %s72
    %p79 = scmp.eq.s32.totalorder %s20, 1
    %p80 = por %p78, %p79
    %p81 = scmp.ne.s32.totalorder %s72, %s73
    %p82 = scmp.eq.s32.totalorder %s20, 0
    %p83 = por %p81, %p82
    %p84 = scmp.ne.s32.totalorder %s72, %s73
    %p85 = scmp.eq.s32.totalorder %s21, 1
    %p86 = por %p84, %p85
    %p88 = scmp.ne.s32.totalorder %s73, %s87
    %p89 = scmp.eq.s32.totalorder %s21, 0
    %p90 = por %p88, %p89
    %s92 = sadd.s32 %s91, 1
    %p95 = scmp.eq.s32.totalorder %s15, 1
    %p96 = scmp.ne.s32.totalorder %s91, %s93
    %p97 = scmp.eq.s32.totalorder %s15, 0
    %p98 = por %p96, %p97
    %p99 = scmp.ne.s32.totalorder %s91, %s93
    %p100 = scmp.eq.s32.totalorder %s20, 1
    %p101 = por %p99, %p100
    %p102 = scmp.ne.s32.totalorder %s93, %s94
    %p103 = scmp.eq.s32.totalorder %s20, 0
    %p104 = por %p102, %p103
    %p105 = scmp.ne.s32.totalorder %s93, %s94
    %p106 = scmp.eq.s32.totalorder %s21, 1
    %p107 = por %p105, %p106
    %p109 = scmp.ne.s32.totalorder %s94, %s108
    %p110 = scmp.eq.s32.totalorder %s21, 0
    %p111 = por %p109, %p110
    %s113 = sadd.s32 %s112, 1
    %p116 = scmp.eq.s32.totalorder %s15, 1
    %p117 = scmp.ne.s32.totalorder %s112, %s114
    %p118 = scmp.eq.s32.totalorder %s15, 0
    %p119 = por %p117, %p118
    %p120 = scmp.ne.s32.totalorder %s112, %s114
    %p121 = scmp.eq.s32.totalorder %s20, 1
    %p122 = por %p120, %p121
    %p123 = scmp.ne.s32.totalorder %s114, %s115
    %p124 = scmp.eq.s32.totalorder %s20, 0
    %p125 = por %p123, %p124
    %p126 = scmp.ne.s32.totalorder %s114, %s115
    %p127 = scmp.eq.s32.totalorder %s21, 1
    %p128 = por %p126, %p127
    %p130 = scmp.ne.s32.totalorder %s115, %s129
    %p131 = scmp.eq.s32.totalorder %s21, 0
    %p132 = por %p130, %p131
    %s134 = sadd.s32 %s133, 1
    %p137 = scmp.eq.s32.totalorder %s15, 1
    %p138 = scmp.ne.s32.totalorder %s133, %s135
    %p139 = scmp.eq.s32.totalorder %s15, 0
    %p140 = por %p138, %p139
    %p141 = scmp.ne.s32.totalorder %s133, %s135
    %p142 = scmp.eq.s32.totalorder %s20, 1
    %p143 = por %p141, %p142
    %p144 = scmp.ne.s32.totalorder %s135, %s136
    %p145 = scmp.eq.s32.totalorder %s20, 0
    %p146 = por %p144, %p145
    %p147 = scmp.ne.s32.totalorder %s135, %s136
    %p148 = scmp.eq.s32.totalorder %s21, 1
    %p149 = por %p147, %p148
    %p151 = scmp.ne.s32.totalorder %s136, %s150
    %p152 = scmp.eq.s32.totalorder %s21, 0
    %p153 = por %p151, %p152
    %s155 = sadd.s32 %s154, 1
    %p158 = scmp.eq.s32.totalorder %s15, 1
    %p159 = scmp.ne.s32.totalorder %s154, %s156
    %p160 = scmp.eq.s32.totalorder %s15, 0
    %p161 = por %p159, %p160
    %p162 = scmp.ne.s32.totalorder %s154, %s156
    %p163 = scmp.eq.s32.totalorder %s20, 1
    %p164 = por %p162, %p163
    %p165 = scmp.ne.s32.totalorder %s156, %s157
    %p166 = scmp.eq.s32.totalorder %s20, 0
    %p167 = por %p165, %p166
    %p168 = scmp.ne.s32.totalorder %s156, %s157
    %p169 = scmp.eq.s32.totalorder %s21, 1
    %p170 = por %p168, %p169
    %p172 = scmp.ne.s32.totalorder %s157, %s171
    %p173 = scmp.eq.s32.totalorder %s21, 0
    %p174 = por %p172, %p173
    %s175 = ssub.s32 %s15, %s22
    %p176 = scmp.eq.s32.totalorder %s175, 0
    %s178 = sadd.s32 %s177, 1
    %s179 = scalar_select %p176, %s177, %s178
    %p182 = pneg %p176
    %p183 = scmp.eq.s32.totalorder %s15, 1
    %p184 = por %p182, %p183
    %p185 = scmp.ne.s32.totalorder %s177, %s180
    %p186 = scmp.eq.s32.totalorder %s15, 0
    %p187 = por %p185, %p186
    %p188 = scmp.ne.s32.totalorder %s177, %s180
    %p189 = scmp.eq.s32.totalorder %s20, 1
    %p190 = por %p188, %p189
    %p191 = scmp.ne.s32.totalorder %s180, %s181
    %p192 = scmp.eq.s32.totalorder %s20, 0
    %p193 = por %p191, %p192
    %p194 = scmp.ne.s32.totalorder %s180, %s181
    %p195 = scmp.eq.s32.totalorder %s21, 1
    %p196 = por %p194, %p195
    %p198 = scmp.ne.s32.totalorder %s181, %s197
    %p199 = scmp.eq.s32.totalorder %s21, 0
    %p200 = por %p198, %p199
    %p201 = scmp.le.s32.totalorder 1, %s15
    %p202 = scmp.lt.s32.totalorder %s15, 3
    %p203 = pnand %p201, %p202
    %p204 = pneg %p203
    // Predicated region
    $region9: #{critic_net_forward.1} parent=5 // pred_check
      _
    $region10: #{critic_net_forward.1} parent=5 // pred_check_branch
      %206 = sbr.rel (%p203) target = $region12
    $region11: #{critic_net_forward.1} parent=5 // pred_region
      %s207 = ssub.s32 %s15, 1
      // Predicated region
      $region13: #{critic_net_forward.1} parent=11 // pred_check
        %p208 = pneg %p62
      $region14: #{critic_net_forward.1} parent=11 // pred_check_branch
        %210 = sbr.rel (%p208) target = $region16
      $region15: #{critic_net_forward.1} parent=11 // pred_region
        _
      $region16: #{critic_net_forward.1} parent=11 // pred_fallthru
        _
      // Predicated region
      $region17: #{critic_net_forward.1} parent=11 // pred_check
        %p211 = pneg %p83
      $region18: #{critic_net_forward.1} parent=11 // pred_check_branch
        %213 = sbr.rel (%p211) target = $region20
      $region19: #{critic_net_forward.1} parent=11 // pred_region
        _
      $region20: #{critic_net_forward.1} parent=11 // pred_fallthru
        _
      // Predicated region
      $region21: #{critic_net_forward.1} parent=11 // pred_check
        %p214 = pneg %p104
      $region22: #{critic_net_forward.1} parent=11 // pred_check_branch
        %216 = sbr.rel (%p214) target = $region24
      $region23: #{critic_net_forward.1} parent=11 // pred_region
        _
      $region24: #{critic_net_forward.1} parent=11 // pred_fallthru
        _
      // Predicated region
      $region25: #{critic_net_forward.1} parent=11 // pred_check
        %p217 = pneg %p125
      $region26: #{critic_net_forward.1} parent=11 // pred_check_branch
        %219 = sbr.rel (%p217) target = $region28
      $region27: #{critic_net_forward.1} parent=11 // pred_region
        _
      $region28: #{critic_net_forward.1} parent=11 // pred_fallthru
        _
      // Predicated region
      $region29: #{critic_net_forward.1} parent=11 // pred_check
        %p220 = pneg %p146
      $region30: #{critic_net_forward.1} parent=11 // pred_check_branch
        %222 = sbr.rel (%p220) target = $region32
      $region31: #{critic_net_forward.1} parent=11 // pred_region
        _
      $region32: #{critic_net_forward.1} parent=11 // pred_fallthru
        _
      // Predicated region
      $region33: #{critic_net_forward.1} parent=11 // pred_check
        %p223 = pneg %p167
      $region34: #{critic_net_forward.1} parent=11 // pred_check_branch
        %225 = sbr.rel (%p223) target = $region36
      $region35: #{critic_net_forward.1} parent=11 // pred_region
        _
      $region36: #{critic_net_forward.1} parent=11 // pred_fallthru
        _
    $region12: #{critic_net_forward.1} parent=5 // pred_fallthru
      _
    %p226 = scmp.lt.s32.totalorder %s15, 2
    // Predicated region
    $region37: #{critic_net_forward.1} parent=5 // pred_check
      %p227 = pneg %p226
    $region38: #{critic_net_forward.1} parent=5 // pred_check_branch
      %229 = sbr.rel (%p227) target = $region40
    $region39: #{critic_net_forward.1} parent=5 // pred_region
      // Predicated region
      $region41: #{critic_net_forward.1} parent=39 // pred_check
        %p230 = pneg %p35
      $region42: #{critic_net_forward.1} parent=39 // pred_check_branch
        %232 = sbr.rel (%p230) target = $region44
      $region43: #{critic_net_forward.1} parent=39 // pred_region
        %s233 = smul.u32 64, %s15
        %p234 = scmp.lt.s32.totalorder %s233, 127
        %s235 = scalar_select %p234, %s233, 127
        %s236 = smul.addr %s235, 8
        %s237 = scalar_lea.vmem %s0, %s236
        %s238 = smul.u32 64, %s15
      $region44: #{critic_net_forward.1} parent=39 // pred_fallthru
        _
    $region40: #{critic_net_forward.1} parent=5 // pred_fallthru
      _
    %p239 = scmp.le.s32.totalorder 1, %s15
    %p240 = scmp.lt.s32.totalorder %s15, 3
    %p241 = pnand %p239, %p240
    %p242 = pneg %p241
    // Predicated region
    $region45: #{critic_net_forward.1} parent=5 // pred_check
      _
    $region46: #{critic_net_forward.1} parent=5 // pred_check_branch
      %244 = sbr.rel (%p241) target = $region48
    $region47: #{critic_net_forward.1} parent=5 // pred_region
      %s245 = ssub.s32 %s15, 1
      %s246 = smul.u32 64, %s20
      %p247 = scmp.lt.s32.totalorder %s246, 127
      %s248 = scalar_select %p247, %s246, 127
      %s249 = smul.addr %s248, 8
      %s250 = scalar_lea.vmem %s0, %s249
      %p251 = pneg %p41
      %p252 = pneg %p38
      %p253 = pneg %p62
      %p254 = pneg %p59
      %p255 = pneg %p83
      %p256 = pneg %p80
      %p257 = pneg %p104
      %p258 = pneg %p101
      %p259 = pneg %p125
      %p260 = pneg %p122
      %p261 = pneg %p146
      %p262 = pneg %p143
      %p263 = pneg %p167
      %p264 = pneg %p164
      %p265 = pneg %p193
      %p266 = pneg %p190
      %s267 = smul.u32 64, %s20
      %p268 = scmp.lt.s32.totalorder %s267, 127
      %s269 = scalar_select %p268, %s267, 127
      %s270 = smul.addr %s269, 8
      %s271 = scalar_lea.vmem %s7, %s270
      %s272 = smul.u32 64, %s20
      %p273 = scmp.lt.s32.totalorder %s272, 127
      %s274 = scalar_select %p273, %s272, 127
      %s275 = smul.addr %s274, 8
      %s276 = scalar_lea.vmem %s0, %s275
      %s277 = smul.u32 64, %s20
      %s278 = smul.u32 64, %s20
      %p279 = scmp.lt.s32.totalorder %s278, 127
      %s280 = scalar_select %p279, %s278, 127
      %s281 = smul.addr %s280, 8
      %s282 = scalar_lea.vmem %s7, %s281
      %s283 = smul.u32 64, %s20
      %v285 = vld [vmem:[%s276] sm:$0xff]
      %v286 = vld [vmem:[%s276 + $0x8] sm:$0xff]
      %v287 = vld [vmem:[%s276 + $0x10] sm:$0xff]
      %v288 = vld [vmem:[%s276 + $0x18] sm:$0xff]
      %v289 = vld [vmem:[%s276 + $0x20] sm:$0xff]
      %v290 = vld [vmem:[%s276 + $0x28] sm:$0xff]
      %v291 = vld [vmem:[%s276 + $0x30] sm:$0xff]
      %v292 = vld [vmem:[%s276 + $0x38] sm:$0xff]
      %v293 = vld [vmem:[%s276 + $0x40] sm:$0xff]
      %v294 = vld [vmem:[%s276 + $0x48] sm:$0xff]
      %v295 = vld [vmem:[%s276 + $0x50] sm:$0xff]
      %v296 = vld [vmem:[%s276 + $0x58] sm:$0xff]
      %v297 = vld [vmem:[%s276 + $0x60] sm:$0xff]
      %v298 = vld [vmem:[%s276 + $0x68] sm:$0xff]
      %v299 = vld [vmem:[%s276 + $0x70] sm:$0xff]
      %v300 = vld [vmem:[%s276 + $0x78] sm:$0xff]
      %v301 = vld [vmem:[%s276 + $0x80] sm:$0xff]
      %v302 = vld [vmem:[%s276 + $0x88] sm:$0xff]
      %v303 = vld [vmem:[%s276 + $0x90] sm:$0xff]
      %v304 = vld [vmem:[%s276 + $0x98] sm:$0xff]
      %v305 = vld [vmem:[%s276 + $0xa0] sm:$0xff]
      %v306 = vld [vmem:[%s276 + $0xa8] sm:$0xff]
      %v307 = vld [vmem:[%s276 + $0xb0] sm:$0xff]
      %v308 = vld [vmem:[%s276 + $0xb8] sm:$0xff]
      %v309 = vld [vmem:[%s276 + $0xc0] sm:$0xff]
      %v310 = vld [vmem:[%s276 + $0xc8] sm:$0xff]
      %v311 = vld [vmem:[%s276 + $0xd0] sm:$0xff]
      %v312 = vld [vmem:[%s276 + $0xd8] sm:$0xff]
      %v313 = vld [vmem:[%s276 + $0xe0] sm:$0xff]
      %v314 = vld [vmem:[%s276 + $0xe8] sm:$0xff]
      %v315 = vld [vmem:[%s276 + $0xf0] sm:$0xff]
      %v316 = vld [vmem:[%s276 + $0xf8] sm:$0xff]
      %v317 = vld [vmem:[%s276 + $0x100] sm:$0xff]
      %v318 = vld [vmem:[%s276 + $0x108] sm:$0xff]
      %v319 = vld [vmem:[%s276 + $0x110] sm:$0xff]
      %v320 = vld [vmem:[%s276 + $0x118] sm:$0xff]
      %v321 = vld [vmem:[%s276 + $0x120] sm:$0xff]
      %v322 = vld [vmem:[%s276 + $0x128] sm:$0xff]
      %v323 = vld [vmem:[%s276 + $0x130] sm:$0xff]
      %v324 = vld [vmem:[%s276 + $0x138] sm:$0xff]
      %v325 = vld [vmem:[%s276 + $0x140] sm:$0xff]
      %v326 = vld [vmem:[%s276 + $0x148] sm:$0xff]
      %v327 = vld [vmem:[%s276 + $0x150] sm:$0xff]
      %v328 = vld [vmem:[%s276 + $0x158] sm:$0xff]
      %v329 = vld [vmem:[%s276 + $0x160] sm:$0xff]
      %v330 = vld [vmem:[%s276 + $0x168] sm:$0xff]
      %v331 = vld [vmem:[%s276 + $0x170] sm:$0xff]
      %v332 = vld [vmem:[%s276 + $0x178] sm:$0xff]
      %v333 = vld [vmem:[%s276 + $0x180] sm:$0xff]
      %v334 = vld [vmem:[%s276 + $0x188] sm:$0xff]
      %v335 = vld [vmem:[%s276 + $0x190] sm:$0xff]
      %v336 = vld [vmem:[%s276 + $0x198] sm:$0xff]
      %v337 = vld [vmem:[%s276 + $0x1a0] sm:$0xff]
      %v338 = vld [vmem:[%s276 + $0x1a8] sm:$0xff]
      %v339 = vld [vmem:[%s276 + $0x1b0] sm:$0xff]
      %v340 = vld [vmem:[%s276 + $0x1b8] sm:$0xff]
      %v341 = vld [vmem:[%s276 + $0x1c0] sm:$0xff]
      %v342 = vld [vmem:[%s276 + $0x1c8] sm:$0xff]
      %v343 = vld [vmem:[%s276 + $0x1d0] sm:$0xff]
      %v344 = vld [vmem:[%s276 + $0x1d8] sm:$0xff]
      %v345 = vld [vmem:[%s276 + $0x1e0] sm:$0xff]
      %v346 = vld [vmem:[%s276 + $0x1e8] sm:$0xff]
      %v347 = vld [vmem:[%s276 + $0x1f0] sm:$0xff]
      %v348 = vld [vmem:[%s276 + $0x1f8] sm:$0xff]
      %v349 = vpack.c.bf16 %v286, %v285
      %v350 = vpack.c.bf16 %v288, %v287
      %v351 = vpack.c.bf16 %v290, %v289
      %v352 = vpack.c.bf16 %v292, %v291
      %v353 = vpack.c.bf16 %v294, %v293
      %v354 = vpack.c.bf16 %v296, %v295
      %v355 = vpack.c.bf16 %v298, %v297
      %v356 = vpack.c.bf16 %v300, %v299
      %v357 = vpack.c.bf16 %v302, %v301
      %v358 = vpack.c.bf16 %v304, %v303
      %v359 = vpack.c.bf16 %v306, %v305
      %v360 = vpack.c.bf16 %v308, %v307
      %v361 = vpack.c.bf16 %v310, %v309
      %v362 = vpack.c.bf16 %v312, %v311
      %v363 = vpack.c.bf16 %v314, %v313
      %v364 = vpack.c.bf16 %v316, %v315
      %v365 = vpack.c.bf16 %v318, %v317
      %v366 = vpack.c.bf16 %v320, %v319
      %v367 = vpack.c.bf16 %v322, %v321
      %v368 = vpack.c.bf16 %v324, %v323
      %v369 = vpack.c.bf16 %v326, %v325
      %v370 = vpack.c.bf16 %v328, %v327
      %v371 = vpack.c.bf16 %v330, %v329
      %v372 = vpack.c.bf16 %v332, %v331
      %v373 = vpack.c.bf16 %v334, %v333
      %v374 = vpack.c.bf16 %v336, %v335
      %v375 = vpack.c.bf16 %v338, %v337
      %v376 = vpack.c.bf16 %v340, %v339
      %v377 = vpack.c.bf16 %v342, %v341
      %v378 = vpack.c.bf16 %v344, %v343
      %v379 = vpack.c.bf16 %v346, %v345
      %v380 = vpack.c.bf16 %v348, %v347
      %v381 = vld [vmem:[%s1] sm:$0xf]
      %v382 = vld [vmem:[%s1 + $0x4] sm:$0xf]
      %v383 = vld [vmem:[%s2] sm:$0x1]
      %v385 = vlaneseq
      %v386 = vshrl.u32 %v385, 7
      %v387 = vsub.s32 0, %v386
      %v388 = vrot.slane %v383, %v387
      %v392 = vunpack.c.l.b16 %v381
      %v393 = vunpack.c.l.b16 %v382
      %v394 = vpack.c.b16 %v393, %v392
      %vm396 = vcmask 130048
      %v398 = vsel %vm396, %v349, 0
      %v401 = vsel %vm396, %v350, 0
      %v404 = vsel %vm396, %v351, 0
      %v407 = vsel %vm396, %v352, 0
      %v410 = vsel %vm396, %v353, 0
      %v413 = vsel %vm396, %v354, 0
      %v416 = vsel %vm396, %v355, 0
      %v419 = vsel %vm396, %v356, 0
      %v422 = vsel %vm396, %v357, 0
      %v425 = vsel %vm396, %v358, 0
      %v428 = vsel %vm396, %v359, 0
      %v431 = vsel %vm396, %v360, 0
      %v434 = vsel %vm396, %v361, 0
      %v437 = vsel %vm396, %v362, 0
      %v440 = vsel %vm396, %v363, 0
      %v443 = vsel %vm396, %v364, 0
      %v446 = vsel %vm396, %v365, 0
      %v449 = vsel %vm396, %v366, 0
      %v452 = vsel %vm396, %v367, 0
      %v455 = vsel %vm396, %v368, 0
      %v458 = vsel %vm396, %v369, 0
      %v461 = vsel %vm396, %v370, 0
      %v464 = vsel %vm396, %v371, 0
      %v467 = vsel %vm396, %v372, 0
      %v470 = vsel %vm396, %v373, 0
      %v473 = vsel %vm396, %v374, 0
      %v476 = vsel %vm396, %v375, 0
      %v479 = vsel %vm396, %v376, 0
      %v482 = vsel %vm396, %v377, 0
      %v485 = vsel %vm396, %v378, 0
      %v488 = vsel %vm396, %v379, 0
      %v491 = vsel %vm396, %v380, 0
      %493 = vmatprep.subr.bf16.mxu0 0
      %494 = vmatpush1.bf16.msra.mxu0 %v394
      %495 = vmatprep.subr.bf16.mxu0 0
      %496 = vmatpush1.bf16.msra.mxu0 0
      %497 = vmatprep.subr.bf16.mxu0 0
      %498 = vmatpush1.bf16.msra.mxu0 0
      %499 = vmatprep.subr.bf16.mxu0 0
      %500 = vmatpush1.bf16.msra.mxu0 0
      %501 = vmatprep.subr.bf16.mxu0 0
      %502 = vmatpush1.bf16.msra.mxu0 0
      %503 = vmatprep.subr.bf16.mxu0 0
      %504 = vmatpush1.bf16.msra.mxu0 0
      %505 = vmatprep.subr.bf16.mxu0 0
      %506 = vmatpush1.bf16.msra.mxu0 0
      %507 = vmatprep.subr.bf16.mxu0 0
      %508 = vmatpush1.bf16.msra.mxu0 0
      %509 = vmatprep.subr.bf16.mxu0 0
      %510 = vmatpush1.bf16.msra.mxu0 0
      %511 = vmatprep.subr.bf16.mxu0 0
      %512 = vmatpush1.bf16.msra.mxu0 0
      %513 = vmatprep.subr.bf16.mxu0 0
      %514 = vmatpush1.bf16.msra.mxu0 0
      %515 = vmatprep.subr.bf16.mxu0 0
      %516 = vmatpush1.bf16.msra.mxu0 0
      %517 = vmatprep.subr.bf16.mxu0 0
      %518 = vmatpush1.bf16.msra.mxu0 0
      %519 = vmatprep.subr.bf16.mxu0 0
      %520 = vmatpush1.bf16.msra.mxu0 0
      %521 = vmatprep.subr.bf16.mxu0 0
      %522 = vmatpush1.bf16.msra.mxu0 0
      %523 = vmatprep.subr.bf16.mxu0 0
      %524 = vmatpush1.bf16.msra.mxu0 0
      %525 = vmatprep.mubr.bf16.mxu0 0
      %526 = vmatmul.mubr.bf16.gmra.mrb[0].mxu0 %v398
      %v527 = vpop.f32.mrb[0].mxu0
      %v528 = vadd.f32 %v388, %v527
      %v529 = vpop.f32.mrb[0].mxu0
      %v530 = vpop.f32.mrb[0].mxu0
      %v531 = vadd.f32 %v388, %v530
      %v532 = vpop.f32.mrb[0].mxu0
      %533 = vmatprep.mubr.bf16.mxu0 0
      %534 = vmatmul.mubr.bf16.gmra.mrb[0].mxu0 %v401
      %v535 = vpop.f32.mrb[0].mxu0
      %v536 = vadd.f32 %v388, %v535
      %v537 = vpop.f32.mrb[0].mxu0
      %v538 = vpop.f32.mrb[0].mxu0
      %v539 = vadd.f32 %v388, %v538
      %v540 = vpop.f32.mrb[0].mxu0
      %541 = vmatprep.mubr.bf16.mxu0 0
      %542 = vmatmul.mubr.bf16.gmra.mrb[0].mxu0 %v404
      %v543 = vpop.f32.mrb[0].mxu0
      %v544 = vadd.f32 %v388, %v543
      %v545 = vpop.f32.mrb[0].mxu0
      %v546 = vpop.f32.mrb[0].mxu0
      %v547 = vadd.f32 %v388, %v546
      %v548 = vpop.f32.mrb[0].mxu0
      %549 = vmatprep.mubr.bf16.mxu0 0
      %550 = vmatmul.mubr.bf16.gmra.mrb[0].mxu0 %v407
      %v551 = vpop.f32.mrb[0].mxu0
      %v552 = vadd.f32 %v388, %v551
      %v553 = vpop.f32.mrb[0].mxu0
      %v554 = vpop.f32.mrb[0].mxu0
      %v555 = vadd.f32 %v388, %v554
      %v556 = vpop.f32.mrb[0].mxu0
      %557 = vmatprep.mubr.bf16.mxu0 0
      %558 = vmatmul.mubr.bf16.gmra.mrb[0].mxu0 %v410
      %v559 = vpop.f32.mrb[0].mxu0
      %v560 = vadd.f32 %v388, %v559
      %v561 = vpop.f32.mrb[0].mxu0
      %v562 = vpop.f32.mrb[0].mxu0
      %v563 = vadd.f32 %v388, %v562
      %v564 = vpop.f32.mrb[0].mxu0
      %565 = vmatprep.mubr.bf16.mxu0 0
      %566 = vmatmul.mubr.bf16.gmra.mrb[0].mxu0 %v413
      %v567 = vpop.f32.mrb[0].mxu0
      %v568 = vadd.f32 %v388, %v567
      %v569 = vpop.f32.mrb[0].mxu0
      %v570 = vpop.f32.mrb[0].mxu0
      %v571 = vadd.f32 %v388, %v570
      %v572 = vpop.f32.mrb[0].mxu0
      %573 = vmatprep.mubr.bf16.mxu0 0
      %574 = vmatmul.mubr.bf16.gmra.mrb[0].mxu0 %v416
      %v575 = vpop.f32.mrb[0].mxu0
      %v576 = vadd.f32 %v388, %v575
      %v577 = vpop.f32.mrb[0].mxu0
      %v578 = vpop.f32.mrb[0].mxu0
      %v579 = vadd.f32 %v388, %v578
      %v580 = vpop.f32.mrb[0].mxu0
      %581 = vmatprep.mubr.bf16.mxu0 0
      %582 = vmatmul.mubr.bf16.gmra.mrb[0].mxu0 %v419
      %v583 = vpop.f32.mrb[0].mxu0
      %v584 = vadd.f32 %v388, %v583
      %v585 = vpop.f32.mrb[0].mxu0
      %v586 = vpop.f32.mrb[0].mxu0
      %v587 = vadd.f32 %v388, %v586
      %v588 = vpop.f32.mrb[0].mxu0
      %589 = vmatprep.mubr.bf16.mxu0 0
      %590 = vmatmul.mubr.bf16.gmra.mrb[0].mxu0 %v422
      %v591 = vpop.f32.mrb[0].mxu0
      %v592 = vadd.f32 %v388, %v591
      %v593 = vpop.f32.mrb[0].mxu0
      %v594 = vpop.f32.mrb[0].mxu0
      %v595 = vadd.f32 %v388, %v594
      %v596 = vpop.f32.mrb[0].mxu0
      %597 = vmatprep.mubr.bf16.mxu0 0
      %598 = vmatmul.mubr.bf16.gmra.mrb[0].mxu0 %v425
      %v599 = vpop.f32.mrb[0].mxu0
      %v600 = vadd.f32 %v388, %v599
      %v601 = vpop.f32.mrb[0].mxu0
      %v602 = vpop.f32.mrb[0].mxu0
      %v603 = vadd.f32 %v388, %v602
      %v604 = vpop.f32.mrb[0].mxu0
      %605 = vmatprep.mubr.bf16.mxu0 0
      %606 = vmatmul.mubr.bf16.gmra.mrb[0].mxu0 %v428
      %v607 = vpop.f32.mrb[0].mxu0
      %v608 = vadd.f32 %v388, %v607
      %v609 = vpop.f32.mrb[0].mxu0
      %v610 = vpop.f32.mrb[0].mxu0
      %v611 = vadd.f32 %v388, %v610
      %v612 = vpop.f32.mrb[0].mxu0
      %613 = vmatprep.mubr.bf16.mxu0 0
      %614 = vmatmul.mubr.bf16.gmra.mrb[0].mxu0 %v431
      %v615 = vpop.f32.mrb[0].mxu0
      %v616 = vadd.f32 %v388, %v615
      %v617 = vpop.f32.mrb[0].mxu0
      %v618 = vpop.f32.mrb[0].mxu0
      %v619 = vadd.f32 %v388, %v618
      %v620 = vpop.f32.mrb[0].mxu0
      %621 = vmatprep.mubr.bf16.mxu0 0
      %622 = vmatmul.mubr.bf16.gmra.mrb[0].mxu0 %v434
      %v623 = vpop.f32.mrb[0].mxu0
      %v624 = vadd.f32 %v388, %v623
      %v625 = vpop.f32.mrb[0].mxu0
      %v626 = vpop.f32.mrb[0].mxu0
      %v627 = vadd.f32 %v388, %v626
      %v628 = vpop.f32.mrb[0].mxu0
      %629 = vmatprep.mubr.bf16.mxu0 0
      %630 = vmatmul.mubr.bf16.gmra.mrb[0].mxu0 %v437
      %v631 = vpop.f32.mrb[0].mxu0
      %v632 = vadd.f32 %v388, %v631
      %v633 = vpop.f32.mrb[0].mxu0
      %v634 = vpop.f32.mrb[0].mxu0
      %v635 = vadd.f32 %v388, %v634
      %v636 = vpop.f32.mrb[0].mxu0
      %637 = vmatprep.mubr.bf16.mxu0 0
      %638 = vmatmul.mubr.bf16.gmra.mrb[0].mxu0 %v440
      %v639 = vpop.f32.mrb[0].mxu0
      %v640 = vadd.f32 %v388, %v639
      %v641 = vpop.f32.mrb[0].mxu0
      %v642 = vpop.f32.mrb[0].mxu0
      %v643 = vadd.f32 %v388, %v642
      %v644 = vpop.f32.mrb[0].mxu0
      %645 = vmatprep.mubr.bf16.mxu0 0
      %646 = vmatmul.mubr.bf16.gmra.mrb[0].mxu0 %v443
      %v647 = vpop.f32.mrb[0].mxu0
      %v648 = vadd.f32 %v388, %v647
      %v649 = vpop.f32.mrb[0].mxu0
      %v650 = vpop.f32.mrb[0].mxu0
      %v651 = vadd.f32 %v388, %v650
      %v652 = vpop.f32.mrb[0].mxu0
      %653 = vmatprep.mubr.bf16.mxu0 0
      %654 = vmatmul.mubr.bf16.gmra.mrb[0].mxu0 %v446
      %v655 = vpop.f32.mrb[0].mxu0
      %v656 = vadd.f32 %v388, %v655
      %v657 = vpop.f32.mrb[0].mxu0
      %v658 = vpop.f32.mrb[0].mxu0
      %v659 = vadd.f32 %v388, %v658
      %v660 = vpop.f32.mrb[0].mxu0
      %661 = vmatprep.mubr.bf16.mxu0 0
      %662 = vmatmul.mubr.bf16.gmra.mrb[0].mxu0 %v449
      %v663 = vpop.f32.mrb[0].mxu0
      %v664 = vadd.f32 %v388, %v663
      %v665 = vpop.f32.mrb[0].mxu0
      %v666 = vpop.f32.mrb[0].mxu0
      %v667 = vadd.f32 %v388, %v666
      %v668 = vpop.f32.mrb[0].mxu0
      %669 = vmatprep.mubr.bf16.mxu0 0
      %670 = vmatmul.mubr.bf16.gmra.mrb[0].mxu0 %v452
      %v671 = vpop.f32.mrb[0].mxu0
      %v672 = vadd.f32 %v388, %v671
      %v673 = vpop.f32.mrb[0].mxu0
      %v674 = vpop.f32.mrb[0].mxu0
      %v675 = vadd.f32 %v388, %v674
      %v676 = vpop.f32.mrb[0].mxu0
      %677 = vmatprep.mubr.bf16.mxu0 0
      %678 = vmatmul.mubr.bf16.gmra.mrb[0].mxu0 %v455
      %v679 = vpop.f32.mrb[0].mxu0
      %v680 = vadd.f32 %v388, %v679
      %v681 = vpop.f32.mrb[0].mxu0
      %v682 = vpop.f32.mrb[0].mxu0
      %v683 = vadd.f32 %v388, %v682
      %v684 = vpop.f32.mrb[0].mxu0
      %685 = vmatprep.mubr.bf16.mxu0 0
      %686 = vmatmul.mubr.bf16.gmra.mrb[0].mxu0 %v458
      %v687 = vpop.f32.mrb[0].mxu0
      %v688 = vadd.f32 %v388, %v687
      %v689 = vpop.f32.mrb[0].mxu0
      %v690 = vpop.f32.mrb[0].mxu0
      %v691 = vadd.f32 %v388, %v690
      %v692 = vpop.f32.mrb[0].mxu0
      %693 = vmatprep.mubr.bf16.mxu0 0
      %694 = vmatmul.mubr.bf16.gmra.mrb[0].mxu0 %v461
      %v695 = vpop.f32.mrb[0].mxu0
      %v696 = vadd.f32 %v388, %v695
      %v697 = vpop.f32.mrb[0].mxu0
      %v698 = vpop.f32.mrb[0].mxu0
      %v699 = vadd.f32 %v388, %v698
      %v700 = vpop.f32.mrb[0].mxu0
      %701 = vmatprep.mubr.bf16.mxu0 0
      %702 = vmatmul.mubr.bf16.gmra.mrb[0].mxu0 %v464
      %v703 = vpop.f32.mrb[0].mxu0
      %v704 = vadd.f32 %v388, %v703
      %v705 = vpop.f32.mrb[0].mxu0
      %v706 = vpop.f32.mrb[0].mxu0
      %v707 = vadd.f32 %v388, %v706
      %v708 = vpop.f32.mrb[0].mxu0
      %709 = vmatprep.mubr.bf16.mxu0 0
      %710 = vmatmul.mubr.bf16.gmra.mrb[0].mxu0 %v467
      %v711 = vpop.f32.mrb[0].mxu0
      %v712 = vadd.f32 %v388, %v711
      %v713 = vpop.f32.mrb[0].mxu0
      %v714 = vpop.f32.mrb[0].mxu0
      %v715 = vadd.f32 %v388, %v714
      %v716 = vpop.f32.mrb[0].mxu0
      %717 = vmatprep.mubr.bf16.mxu0 0
      %718 = vmatmul.mubr.bf16.gmra.mrb[0].mxu0 %v470
      %v719 = vpop.f32.mrb[0].mxu0
      %v720 = vadd.f32 %v388, %v719
      %v721 = vpop.f32.mrb[0].mxu0
      %v722 = vpop.f32.mrb[0].mxu0
      %v723 = vadd.f32 %v388, %v722
      %v724 = vpop.f32.mrb[0].mxu0
      %725 = vmatprep.mubr.bf16.mxu0 0
      %726 = vmatmul.mubr.bf16.gmra.mrb[0].mxu0 %v473
      %v727 = vpop.f32.mrb[0].mxu0
      %v728 = vadd.f32 %v388, %v727
      %v729 = vpop.f32.mrb[0].mxu0
      %v730 = vpop.f32.mrb[0].mxu0
      %v731 = vadd.f32 %v388, %v730
      %v732 = vpop.f32.mrb[0].mxu0
      %733 = vmatprep.mubr.bf16.mxu0 0
      %734 = vmatmul.mubr.bf16.gmra.mrb[0].mxu0 %v476
      %v735 = vpop.f32.mrb[0].mxu0
      %v736 = vadd.f32 %v388, %v735
      %v737 = vpop.f32.mrb[0].mxu0
      %v738 = vpop.f32.mrb[0].mxu0
      %v739 = vadd.f32 %v388, %v738
      %v740 = vpop.f32.mrb[0].mxu0
      %741 = vmatprep.mubr.bf16.mxu0 0
      %742 = vmatmul.mubr.bf16.gmra.mrb[0].mxu0 %v479
      %v743 = vpop.f32.mrb[0].mxu0
      %v744 = vadd.f32 %v388, %v743
      %v745 = vpop.f32.mrb[0].mxu0
      %v746 = vpop.f32.mrb[0].mxu0
      %v747 = vadd.f32 %v388, %v746
      %v748 = vpop.f32.mrb[0].mxu0
      %749 = vmatprep.mubr.bf16.mxu0 0
      %750 = vmatmul.mubr.bf16.gmra.mrb[0].mxu0 %v482
      %v751 = vpop.f32.mrb[0].mxu0
      %v752 = vadd.f32 %v388, %v751
      %v753 = vpop.f32.mrb[0].mxu0
      %v754 = vpop.f32.mrb[0].mxu0
      %v755 = vadd.f32 %v388, %v754
      %v756 = vpop.f32.mrb[0].mxu0
      %757 = vmatprep.mubr.bf16.mxu0 0
      %758 = vmatmul.mubr.bf16.gmra.mrb[0].mxu0 %v485
      %v759 = vpop.f32.mrb[0].mxu0
      %v760 = vadd.f32 %v388, %v759
      %v761 = vpop.f32.mrb[0].mxu0
      %v762 = vpop.f32.mrb[0].mxu0
      %v763 = vadd.f32 %v388, %v762
      %v764 = vpop.f32.mrb[0].mxu0
      %765 = vmatprep.mubr.bf16.mxu0 0
      %766 = vmatmul.mubr.bf16.gmra.mrb[0].mxu0 %v488
      %v767 = vpop.f32.mrb[0].mxu0
      %v768 = vadd.f32 %v388, %v767
      %v769 = vpop.f32.mrb[0].mxu0
      %v770 = vpop.f32.mrb[0].mxu0
      %v771 = vadd.f32 %v388, %v770
      %v772 = vpop.f32.mrb[0].mxu0
      %773 = vmatprep.mubr.bf16.mxu0 0
      %774 = vmatmul.mubr.bf16.gmra.mrb[0].mxu0 %v491
      %v775 = vpop.f32.mrb[0].mxu0
      %v776 = vadd.f32 %v388, %v775
      %v777 = vpop.f32.mrb[0].mxu0
      %v778 = vpop.f32.mrb[0].mxu0
      %v779 = vadd.f32 %v388, %v778
      %v780 = vpop.f32.mrb[0].mxu0
      %781 = vdwg.mxu0
      %v782 = vmax.f32 %v528, 0.0
      %v783 = vmax.f32 %v531, 0.0
      %v784 = vmax.f32 %v536, 0.0
      %v785 = vmax.f32 %v539, 0.0
      %v786 = vmax.f32 %v544, 0.0
      %v787 = vmax.f32 %v547, 0.0
      %v788 = vmax.f32 %v552, 0.0
      %v789 = vmax.f32 %v555, 0.0
      %v790 = vmax.f32 %v560, 0.0
      %v791 = vmax.f32 %v563, 0.0
      %v792 = vmax.f32 %v568, 0.0
      %v793 = vmax.f32 %v571, 0.0
      %v794 = vmax.f32 %v576, 0.0
      %v795 = vmax.f32 %v579, 0.0
      %v796 = vmax.f32 %v584, 0.0
      %v797 = vmax.f32 %v587, 0.0
      %v798 = vmax.f32 %v592, 0.0
      %v799 = vmax.f32 %v595, 0.0
      %v800 = vmax.f32 %v600, 0.0
      %v801 = vmax.f32 %v603, 0.0
      %v802 = vmax.f32 %v608, 0.0
      %v803 = vmax.f32 %v611, 0.0
      %v804 = vmax.f32 %v616, 0.0
      %v805 = vmax.f32 %v619, 0.0
      %v806 = vmax.f32 %v624, 0.0
      %v807 = vmax.f32 %v627, 0.0
      %v808 = vmax.f32 %v632, 0.0
      %v809 = vmax.f32 %v635, 0.0
      %v810 = vmax.f32 %v640, 0.0
      %v811 = vmax.f32 %v643, 0.0
      %v812 = vmax.f32 %v648, 0.0
      %v813 = vmax.f32 %v651, 0.0
      %v814 = vmax.f32 %v656, 0.0
      %v815 = vmax.f32 %v659, 0.0
      %v816 = vmax.f32 %v664, 0.0
      %v817 = vmax.f32 %v667, 0.0
      %v818 = vmax.f32 %v672, 0.0
      %v819 = vmax.f32 %v675, 0.0
      %v820 = vmax.f32 %v680, 0.0
      %v821 = vmax.f32 %v683, 0.0
      %v822 = vmax.f32 %v688, 0.0
      %v823 = vmax.f32 %v691, 0.0
      %v824 = vmax.f32 %v696, 0.0
      %v825 = vmax.f32 %v699, 0.0
      %v826 = vmax.f32 %v704, 0.0
      %v827 = vmax.f32 %v707, 0.0
      %v828 = vmax.f32 %v712, 0.0
      %v829 = vmax.f32 %v715, 0.0
      %v830 = vmax.f32 %v720, 0.0
      %v831 = vmax.f32 %v723, 0.0
      %v832 = vmax.f32 %v728, 0.0
      %v833 = vmax.f32 %v731, 0.0
      %v834 = vmax.f32 %v736, 0.0
      %v835 = vmax.f32 %v739, 0.0
      %v836 = vmax.f32 %v744, 0.0
      %v837 = vmax.f32 %v747, 0.0
      %v838 = vmax.f32 %v752, 0.0
      %v839 = vmax.f32 %v755, 0.0
      %v840 = vmax.f32 %v760, 0.0
      %v841 = vmax.f32 %v763, 0.0
      %v842 = vmax.f32 %v768, 0.0
      %v843 = vmax.f32 %v771, 0.0
      %v844 = vmax.f32 %v776, 0.0
      %v845 = vmax.f32 %v779, 0.0
      %v846 = vpack.c.bf16 %v783, %v782
      %v847 = vpack.c.bf16 %v785, %v784
      %v848 = vpack.c.bf16 %v787, %v786
      %v849 = vpack.c.bf16 %v789, %v788
      %v850 = vpack.c.bf16 %v791, %v790
      %v851 = vpack.c.bf16 %v793, %v792
      %v852 = vpack.c.bf16 %v795, %v794
      %v853 = vpack.c.bf16 %v797, %v796
      %v854 = vpack.c.bf16 %v799, %v798
      %v855 = vpack.c.bf16 %v801, %v800
      %v856 = vpack.c.bf16 %v803, %v802
      %v857 = vpack.c.bf16 %v805, %v804
      %v858 = vpack.c.bf16 %v807, %v806
      %v859 = vpack.c.bf16 %v809, %v808
      %v860 = vpack.c.bf16 %v811, %v810
      %v861 = vpack.c.bf16 %v813, %v812
      %v862 = vpack.c.bf16 %v815, %v814
      %v863 = vpack.c.bf16 %v817, %v816
      %v864 = vpack.c.bf16 %v819, %v818
      %v865 = vpack.c.bf16 %v821, %v820
      %v866 = vpack.c.bf16 %v823, %v822
      %v867 = vpack.c.bf16 %v825, %v824
      %v868 = vpack.c.bf16 %v827, %v826
      %v869 = vpack.c.bf16 %v829, %v828
      %v870 = vpack.c.bf16 %v831, %v830
      %v871 = vpack.c.bf16 %v833, %v832
      %v872 = vpack.c.bf16 %v835, %v834
      %v873 = vpack.c.bf16 %v837, %v836
      %v874 = vpack.c.bf16 %v839, %v838
      %v875 = vpack.c.bf16 %v841, %v840
      %v876 = vpack.c.bf16 %v843, %v842
      %v877 = vpack.c.bf16 %v845, %v844
      %v878 = vld [vmem:[%s3] sm:$0xf]
      %v879 = vld [vmem:[%s3 + $0x4] sm:$0xf]
      %v880 = vld [vmem:[%s3 + $0x8] sm:$0xf]
      %v881 = vld [vmem:[%s3 + $0xc] sm:$0xf]
      %v882 = vld [vmem:[%s3 + $0x10] sm:$0xf]
      %v883 = vld [vmem:[%s3 + $0x14] sm:$0xf]
      %v884 = vld [vmem:[%s3 + $0x18] sm:$0xf]
      %v885 = vld [vmem:[%s3 + $0x1c] sm:$0xf]
      %v886 = vld [vmem:[%s3 + $0x20] sm:$0xf]
      %v887 = vld [vmem:[%s3 + $0x24] sm:$0xf]
      %v888 = vld [vmem:[%s3 + $0x28] sm:$0xf]
      %v889 = vld [vmem:[%s3 + $0x2c] sm:$0xf]
      %v890 = vld [vmem:[%s3 + $0x30] sm:$0xf]
      %v891 = vld [vmem:[%s3 + $0x34] sm:$0xf]
      %v892 = vld [vmem:[%s3 + $0x38] sm:$0xf]
      %v893 = vld [vmem:[%s3 + $0x3c] sm:$0xf]
      %v894 = vld [vmem:[%s4] sm:$0x1]
      %v896 = vlaneseq
      %v897 = vshrl.u32 %v896, 7
      %v898 = vsub.s32 0, %v897
      %v899 = vrot.slane %v894, %v898
      %v917 = vunpack.c.l.b16 %v878
      %v918 = vunpack.c.l.b16 %v879
      %v919 = vunpack.c.l.b16 %v880
      %v920 = vunpack.c.l.b16 %v881
      %v921 = vunpack.c.l.b16 %v882
      %v922 = vunpack.c.l.b16 %v883
      %v923 = vunpack.c.l.b16 %v884
      %v924 = vunpack.c.l.b16 %v885
      %v925 = vunpack.c.l.b16 %v886
      %v926 = vunpack.c.l.b16 %v887
      %v927 = vunpack.c.l.b16 %v888
      %v928 = vunpack.c.l.b16 %v889
      %v929 = vunpack.c.l.b16 %v890
      %v930 = vunpack.c.l.b16 %v891
      %v931 = vunpack.c.l.b16 %v892
      %v932 = vunpack.c.l.b16 %v893
      %v933 = vpack.c.b16 %v918, %v917
      %v934 = vpack.c.b16 %v920, %v919
      %v935 = vpack.c.b16 %v922, %v921
      %v936 = vpack.c.b16 %v924, %v923
      %v937 = vpack.c.b16 %v926, %v925
      %v938 = vpack.c.b16 %v928, %v927
      %v939 = vpack.c.b16 %v930, %v929
      %v940 = vpack.c.b16 %v932, %v931
      %949 = vmatprep.subr.bf16.mxu0 0
      %950 = vmatpush1.bf16.msra.mxu0 %v933
      %951 = vmatprep.subr.bf16.mxu0 0
      %952 = vmatpush1.bf16.msra.mxu0 %v934
      %953 = vmatprep.subr.bf16.mxu0 0
      %954 = vmatpush1.bf16.msra.mxu0 %v935
      %955 = vmatprep.subr.bf16.mxu0 0
      %956 = vmatpush1.bf16.msra.mxu0 %v936
      %957 = vmatprep.subr.bf16.mxu0 0
      %958 = vmatpush1.bf16.msra.mxu0 %v937
      %959 = vmatprep.subr.bf16.mxu0 0
      %960 = vmatpush1.bf16.msra.mxu0 %v938
      %961 = vmatprep.subr.bf16.mxu0 0
      %962 = vmatpush1.bf16.msra.mxu0 %v939
      %963 = vmatprep.subr.bf16.mxu0 0
      %964 = vmatpush1.bf16.msra.mxu0 %v940
      %965 = vmatprep.subr.bf16.mxu0 0
      %966 = vmatpush1.bf16.msra.mxu0 0
      %967 = vmatprep.subr.bf16.mxu0 0
      %968 = vmatpush1.bf16.msra.mxu0 0
      %969 = vmatprep.subr.bf16.mxu0 0
      %970 = vmatpush1.bf16.msra.mxu0 0
      %971 = vmatprep.subr.bf16.mxu0 0
      %972 = vmatpush1.bf16.msra.mxu0 0
      %973 = vmatprep.subr.bf16.mxu0 0
      %974 = vmatpush1.bf16.msra.mxu0 0
      %975 = vmatprep.subr.bf16.mxu0 0
      %976 = vmatpush1.bf16.msra.mxu0 0
      %977 = vmatprep.subr.bf16.mxu0 0
      %978 = vmatpush1.bf16.msra.mxu0 0
      %979 = vmatprep.subr.bf16.mxu0 0
      %980 = vmatpush1.bf16.msra.mxu0 0
      %981 = vmatprep.mubr.bf16.mxu0 0
      %982 = vmatmul.mubr.bf16.gmra.mrb[0].mxu0 %v846
      %v983 = vpop.f32.mrb[0].mxu0
      %v984 = vadd.f32 %v899, %v983
      %v985 = vpop.f32.mrb[0].mxu0
      %v986 = vpop.f32.mrb[0].mxu0
      %v987 = vadd.f32 %v899, %v986
      %v988 = vpop.f32.mrb[0].mxu0
      %989 = vmatprep.mubr.bf16.mxu0 0
      %990 = vmatmul.mubr.bf16.gmra.mrb[0].mxu0 %v847
      %v991 = vpop.f32.mrb[0].mxu0
      %v992 = vadd.f32 %v899, %v991
      %v993 = vpop.f32.mrb[0].mxu0
      %v994 = vpop.f32.mrb[0].mxu0
      %v995 = vadd.f32 %v899, %v994
      %v996 = vpop.f32.mrb[0].mxu0
      %997 = vmatprep.mubr.bf16.mxu0 0
      %998 = vmatmul.mubr.bf16.gmra.mrb[0].mxu0 %v848
      %v999 = vpop.f32.mrb[0].mxu0
      %v1000 = vadd.f32 %v899, %v999
      %v1001 = vpop.f32.mrb[0].mxu0
      %v1002 = vpop.f32.mrb[0].mxu0
      %v1003 = vadd.f32 %v899, %v1002
      %v1004 = vpop.f32.mrb[0].mxu0
      %1005 = vmatprep.mubr.bf16.mxu0 0
      %1006 = vmatmul.mubr.bf16.gmra.mrb[0].mxu0 %v849
      %v1007 = vpop.f32.mrb[0].mxu0
      %v1008 = vadd.f32 %v899, %v1007
      %v1009 = vpop.f32.mrb[0].mxu0
      %v1010 = vpop.f32.mrb[0].mxu0
      %v1011 = vadd.f32 %v899, %v1010
      %v1012 = vpop.f32.mrb[0].mxu0
      %1013 = vmatprep.mubr.bf16.mxu0 0
      %1014 = vmatmul.mubr.bf16.gmra.mrb[0].mxu0 %v850
      %v1015 = vpop.f32.mrb[0].mxu0
      %v1016 = vadd.f32 %v899, %v1015
      %v1017 = vpop.f32.mrb[0].mxu0
      %v1018 = vpop.f32.mrb[0].mxu0
      %v1019 = vadd.f32 %v899, %v1018
      %v1020 = vpop.f32.mrb[0].mxu0
      %1021 = vmatprep.mubr.bf16.mxu0 0
      %1022 = vmatmul.mubr.bf16.gmra.mrb[0].mxu0 %v851
      %v1023 = vpop.f32.mrb[0].mxu0
      %v1024 = vadd.f32 %v899, %v1023
      %v1025 = vpop.f32.mrb[0].mxu0
      %v1026 = vpop.f32.mrb[0].mxu0
      %v1027 = vadd.f32 %v899, %v1026
      %v1028 = vpop.f32.mrb[0].mxu0
      %1029 = vmatprep.mubr.bf16.mxu0 0
      %1030 = vmatmul.mubr.bf16.gmra.mrb[0].mxu0 %v852
      %v1031 = vpop.f32.mrb[0].mxu0
      %v1032 = vadd.f32 %v899, %v1031
      %v1033 = vpop.f32.mrb[0].mxu0
      %v1034 = vpop.f32.mrb[0].mxu0
      %v1035 = vadd.f32 %v899, %v1034
      %v1036 = vpop.f32.mrb[0].mxu0
      %1037 = vmatprep.mubr.bf16.mxu0 0
      %1038 = vmatmul.mubr.bf16.gmra.mrb[0].mxu0 %v853
      %v1039 = vpop.f32.mrb[0].mxu0
      %v1040 = vadd.f32 %v899, %v1039
      %v1041 = vpop.f32.mrb[0].mxu0
      %v1042 = vpop.f32.mrb[0].mxu0
      %v1043 = vadd.f32 %v899, %v1042
      %v1044 = vpop.f32.mrb[0].mxu0
      %1045 = vmatprep.mubr.bf16.mxu0 0
      %1046 = vmatmul.mubr.bf16.gmra.mrb[0].mxu0 %v854
      %v1047 = vpop.f32.mrb[0].mxu0
      %v1048 = vadd.f32 %v899, %v1047
      %v1049 = vpop.f32.mrb[0].mxu0
      %v1050 = vpop.f32.mrb[0].mxu0
      %v1051 = vadd.f32 %v899, %v1050
      %v1052 = vpop.f32.mrb[0].mxu0
      %1053 = vmatprep.mubr.bf16.mxu0 0
      %1054 = vmatmul.mubr.bf16.gmra.mrb[0].mxu0 %v855
      %v1055 = vpop.f32.mrb[0].mxu0
      %v1056 = vadd.f32 %v899, %v1055
      %v1057 = vpop.f32.mrb[0].mxu0
      %v1058 = vpop.f32.mrb[0].mxu0
      %v1059 = vadd.f32 %v899, %v1058
      %v1060 = vpop.f32.mrb[0].mxu0
      %1061 = vmatprep.mubr.bf16.mxu0 0
      %1062 = vmatmul.mubr.bf16.gmra.mrb[0].mxu0 %v856
      %v1063 = vpop.f32.mrb[0].mxu0
      %v1064 = vadd.f32 %v899, %v1063
      %v1065 = vpop.f32.mrb[0].mxu0
      %v1066 = vpop.f32.mrb[0].mxu0
      %v1067 = vadd.f32 %v899, %v1066
      %v1068 = vpop.f32.mrb[0].mxu0
      %1069 = vmatprep.mubr.bf16.mxu0 0
      %1070 = vmatmul.mubr.bf16.gmra.mrb[0].mxu0 %v857
      %v1071 = vpop.f32.mrb[0].mxu0
      %v1072 = vadd.f32 %v899, %v1071
      %v1073 = vpop.f32.mrb[0].mxu0
      %v1074 = vpop.f32.mrb[0].mxu0
      %v1075 = vadd.f32 %v899, %v1074
      %v1076 = vpop.f32.mrb[0].mxu0
      %1077 = vmatprep.mubr.bf16.mxu0 0
      %1078 = vmatmul.mubr.bf16.gmra.mrb[0].mxu0 %v858
      %v1079 = vpop.f32.mrb[0].mxu0
      %v1080 = vadd.f32 %v899, %v1079
      %v1081 = vpop.f32.mrb[0].mxu0
      %v1082 = vpop.f32.mrb[0].mxu0
      %v1083 = vadd.f32 %v899, %v1082
      %v1084 = vpop.f32.mrb[0].mxu0
      %1085 = vmatprep.mubr.bf16.mxu0 0
      %1086 = vmatmul.mubr.bf16.gmra.mrb[0].mxu0 %v859
      %v1087 = vpop.f32.mrb[0].mxu0
      %v1088 = vadd.f32 %v899, %v1087
      %v1089 = vpop.f32.mrb[0].mxu0
      %v1090 = vpop.f32.mrb[0].mxu0
      %v1091 = vadd.f32 %v899, %v1090
      %v1092 = vpop.f32.mrb[0].mxu0
      %1093 = vmatprep.mubr.bf16.mxu0 0
      %1094 = vmatmul.mubr.bf16.gmra.mrb[0].mxu0 %v860
      %v1095 = vpop.f32.mrb[0].mxu0
      %v1096 = vadd.f32 %v899, %v1095
      %v1097 = vpop.f32.mrb[0].mxu0
      %v1098 = vpop.f32.mrb[0].mxu0
      %v1099 = vadd.f32 %v899, %v1098
      %v1100 = vpop.f32.mrb[0].mxu0
      %1101 = vmatprep.mubr.bf16.mxu0 0
      %1102 = vmatmul.mubr.bf16.gmra.mrb[0].mxu0 %v861
      %v1103 = vpop.f32.mrb[0].mxu0
      %v1104 = vadd.f32 %v899, %v1103
      %v1105 = vpop.f32.mrb[0].mxu0
      %v1106 = vpop.f32.mrb[0].mxu0
      %v1107 = vadd.f32 %v899, %v1106
      %v1108 = vpop.f32.mrb[0].mxu0
      %1109 = vmatprep.mubr.bf16.mxu0 0
      %1110 = vmatmul.mubr.bf16.gmra.mrb[0].mxu0 %v862
      %v1111 = vpop.f32.mrb[0].mxu0
      %v1112 = vadd.f32 %v899, %v1111
      %v1113 = vpop.f32.mrb[0].mxu0
      %v1114 = vpop.f32.mrb[0].mxu0
      %v1115 = vadd.f32 %v899, %v1114
      %v1116 = vpop.f32.mrb[0].mxu0
      %1117 = vmatprep.mubr.bf16.mxu0 0
      %1118 = vmatmul.mubr.bf16.gmra.mrb[0].mxu0 %v863
      %v1119 = vpop.f32.mrb[0].mxu0
      %v1120 = vadd.f32 %v899, %v1119
      %v1121 = vpop.f32.mrb[0].mxu0
      %v1122 = vpop.f32.mrb[0].mxu0
      %v1123 = vadd.f32 %v899, %v1122
      %v1124 = vpop.f32.mrb[0].mxu0
      %1125 = vmatprep.mubr.bf16.mxu0 0
      %1126 = vmatmul.mubr.bf16.gmra.mrb[0].mxu0 %v864
      %v1127 = vpop.f32.mrb[0].mxu0
      %v1128 = vadd.f32 %v899, %v1127
      %v1129 = vpop.f32.mrb[0].mxu0
      %v1130 = vpop.f32.mrb[0].mxu0
      %v1131 = vadd.f32 %v899, %v1130
      %v1132 = vpop.f32.mrb[0].mxu0
      %1133 = vmatprep.mubr.bf16.mxu0 0
      %1134 = vmatmul.mubr.bf16.gmra.mrb[0].mxu0 %v865
      %v1135 = vpop.f32.mrb[0].mxu0
      %v1136 = vadd.f32 %v899, %v1135
      %v1137 = vpop.f32.mrb[0].mxu0
      %v1138 = vpop.f32.mrb[0].mxu0
      %v1139 = vadd.f32 %v899, %v1138
      %v1140 = vpop.f32.mrb[0].mxu0
      %1141 = vmatprep.mubr.bf16.mxu0 0
      %1142 = vmatmul.mubr.bf16.gmra.mrb[0].mxu0 %v866
      %v1143 = vpop.f32.mrb[0].mxu0
      %v1144 = vadd.f32 %v899, %v1143
      %v1145 = vpop.f32.mrb[0].mxu0
      %v1146 = vpop.f32.mrb[0].mxu0
      %v1147 = vadd.f32 %v899, %v1146
      %v1148 = vpop.f32.mrb[0].mxu0
      %1149 = vmatprep.mubr.bf16.mxu0 0
      %1150 = vmatmul.mubr.bf16.gmra.mrb[0].mxu0 %v867
      %v1151 = vpop.f32.mrb[0].mxu0
      %v1152 = vadd.f32 %v899, %v1151
      %v1153 = vpop.f32.mrb[0].mxu0
      %v1154 = vpop.f32.mrb[0].mxu0
      %v1155 = vadd.f32 %v899, %v1154
      %v1156 = vpop.f32.mrb[0].mxu0
      %1157 = vmatprep.mubr.bf16.mxu0 0
      %1158 = vmatmul.mubr.bf16.gmra.mrb[0].mxu0 %v868
      %v1159 = vpop.f32.mrb[0].mxu0
      %v1160 = vadd.f32 %v899, %v1159
      %v1161 = vpop.f32.mrb[0].mxu0
      %v1162 = vpop.f32.mrb[0].mxu0
      %v1163 = vadd.f32 %v899, %v1162
      %v1164 = vpop.f32.mrb[0].mxu0
      %1165 = vmatprep.mubr.bf16.mxu0 0
      %1166 = vmatmul.mubr.bf16.gmra.mrb[0].mxu0 %v869
      %v1167 = vpop.f32.mrb[0].mxu0
      %v1168 = vadd.f32 %v899, %v1167
      %v1169 = vpop.f32.mrb[0].mxu0
      %v1170 = vpop.f32.mrb[0].mxu0
      %v1171 = vadd.f32 %v899, %v1170
      %v1172 = vpop.f32.mrb[0].mxu0
      %1173 = vmatprep.mubr.bf16.mxu0 0
      %1174 = vmatmul.mubr.bf16.gmra.mrb[0].mxu0 %v870
      %v1175 = vpop.f32.mrb[0].mxu0
      %v1176 = vadd.f32 %v899, %v1175
      %v1177 = vpop.f32.mrb[0].mxu0
      %v1178 = vpop.f32.mrb[0].mxu0
      %v1179 = vadd.f32 %v899, %v1178
      %v1180 = vpop.f32.mrb[0].mxu0
      %1181 = vmatprep.mubr.bf16.mxu0 0
      %1182 = vmatmul.mubr.bf16.gmra.mrb[0].mxu0 %v871
      %v1183 = vpop.f32.mrb[0].mxu0
      %v1184 = vadd.f32 %v899, %v1183
      %v1185 = vpop.f32.mrb[0].mxu0
      %v1186 = vpop.f32.mrb[0].mxu0
      %v1187 = vadd.f32 %v899, %v1186
      %v1188 = vpop.f32.mrb[0].mxu0
      %1189 = vmatprep.mubr.bf16.mxu0 0
      %1190 = vmatmul.mubr.bf16.gmra.mrb[0].mxu0 %v872
      %v1191 = vpop.f32.mrb[0].mxu0
      %v1192 = vadd.f32 %v899, %v1191
      %v1193 = vpop.f32.mrb[0].mxu0
      %v1194 = vpop.f32.mrb[0].mxu0
      %v1195 = vadd.f32 %v899, %v1194
      %v1196 = vpop.f32.mrb[0].mxu0
      %1197 = vmatprep.mubr.bf16.mxu0 0
      %1198 = vmatmul.mubr.bf16.gmra.mrb[0].mxu0 %v873
      %v1199 = vpop.f32.mrb[0].mxu0
      %v1200 = vadd.f32 %v899, %v1199
      %v1201 = vpop.f32.mrb[0].mxu0
      %v1202 = vpop.f32.mrb[0].mxu0
      %v1203 = vadd.f32 %v899, %v1202
      %v1204 = vpop.f32.mrb[0].mxu0
      %1205 = vmatprep.mubr.bf16.mxu0 0
      %1206 = vmatmul.mubr.bf16.gmra.mrb[0].mxu0 %v874
      %v1207 = vpop.f32.mrb[0].mxu0
      %v1208 = vadd.f32 %v899, %v1207
      %v1209 = vpop.f32.mrb[0].mxu0
      %v1210 = vpop.f32.mrb[0].mxu0
      %v1211 = vadd.f32 %v899, %v1210
      %v1212 = vpop.f32.mrb[0].mxu0
      %1213 = vmatprep.mubr.bf16.mxu0 0
      %1214 = vmatmul.mubr.bf16.gmra.mrb[0].mxu0 %v875
      %v1215 = vpop.f32.mrb[0].mxu0
      %v1216 = vadd.f32 %v899, %v1215
      %v1217 = vpop.f32.mrb[0].mxu0
      %v1218 = vpop.f32.mrb[0].mxu0
      %v1219 = vadd.f32 %v899, %v1218
      %v1220 = vpop.f32.mrb[0].mxu0
      %1221 = vmatprep.mubr.bf16.mxu0 0
      %1222 = vmatmul.mubr.bf16.gmra.mrb[0].mxu0 %v876
      %v1223 = vpop.f32.mrb[0].mxu0
      %v1224 = vadd.f32 %v899, %v1223
      %v1225 = vpop.f32.mrb[0].mxu0
      %v1226 = vpop.f32.mrb[0].mxu0
      %v1227 = vadd.f32 %v899, %v1226
      %v1228 = vpop.f32.mrb[0].mxu0
      %1229 = vmatprep.mubr.bf16.mxu0 0
      %1230 = vmatmul.mubr.bf16.gmra.mrb[0].mxu0 %v877
      %v1231 = vpop.f32.mrb[0].mxu0
      %v1232 = vadd.f32 %v899, %v1231
      %v1233 = vpop.f32.mrb[0].mxu0
      %v1234 = vpop.f32.mrb[0].mxu0
      %v1235 = vadd.f32 %v899, %v1234
      %v1236 = vpop.f32.mrb[0].mxu0
      %1237 = vdwg.mxu0
      %v1238 = vmax.f32 %v984, 0.0
      %v1239 = vmax.f32 %v987, 0.0
      %v1240 = vmax.f32 %v992, 0.0
      %v1241 = vmax.f32 %v995, 0.0
      %v1242 = vmax.f32 %v1000, 0.0
      %v1243 = vmax.f32 %v1003, 0.0
      %v1244 = vmax.f32 %v1008, 0.0
      %v1245 = vmax.f32 %v1011, 0.0
      %v1246 = vmax.f32 %v1016, 0.0
      %v1247 = vmax.f32 %v1019, 0.0
      %v1248 = vmax.f32 %v1024, 0.0
      %v1249 = vmax.f32 %v1027, 0.0
      %v1250 = vmax.f32 %v1032, 0.0
      %v1251 = vmax.f32 %v1035, 0.0
      %v1252 = vmax.f32 %v1040, 0.0
      %v1253 = vmax.f32 %v1043, 0.0
      %v1254 = vmax.f32 %v1048, 0.0
      %v1255 = vmax.f32 %v1051, 0.0
      %v1256 = vmax.f32 %v1056, 0.0
      %v1257 = vmax.f32 %v1059, 0.0
      %v1258 = vmax.f32 %v1064, 0.0
      %v1259 = vmax.f32 %v1067, 0.0
      %v1260 = vmax.f32 %v1072, 0.0
      %v1261 = vmax.f32 %v1075, 0.0
      %v1262 = vmax.f32 %v1080, 0.0
      %v1263 = vmax.f32 %v1083, 0.0
      %v1264 = vmax.f32 %v1088, 0.0
      %v1265 = vmax.f32 %v1091, 0.0
      %v1266 = vmax.f32 %v1096, 0.0
      %v1267 = vmax.f32 %v1099, 0.0
      %v1268 = vmax.f32 %v1104, 0.0
      %v1269 = vmax.f32 %v1107, 0.0
      %v1270 = vmax.f32 %v1112, 0.0
      %v1271 = vmax.f32 %v1115, 0.0
      %v1272 = vmax.f32 %v1120, 0.0
      %v1273 = vmax.f32 %v1123, 0.0
      %v1274 = vmax.f32 %v1128, 0.0
      %v1275 = vmax.f32 %v1131, 0.0
      %v1276 = vmax.f32 %v1136, 0.0
      %v1277 = vmax.f32 %v1139, 0.0
      %v1278 = vmax.f32 %v1144, 0.0
      %v1279 = vmax.f32 %v1147, 0.0
      %v1280 = vmax.f32 %v1152, 0.0
      %v1281 = vmax.f32 %v1155, 0.0
      %v1282 = vmax.f32 %v1160, 0.0
      %v1283 = vmax.f32 %v1163, 0.0
      %v1284 = vmax.f32 %v1168, 0.0
      %v1285 = vmax.f32 %v1171, 0.0
      %v1286 = vmax.f32 %v1176, 0.0
      %v1287 = vmax.f32 %v1179, 0.0
      %v1288 = vmax.f32 %v1184, 0.0
      %v1289 = vmax.f32 %v1187, 0.0
      %v1290 = vmax.f32 %v1192, 0.0
      %v1291 = vmax.f32 %v1195, 0.0
      %v1292 = vmax.f32 %v1200, 0.0
      %v1293 = vmax.f32 %v1203, 0.0
      %v1294 = vmax.f32 %v1208, 0.0
      %v1295 = vmax.f32 %v1211, 0.0
      %v1296 = vmax.f32 %v1216, 0.0
      %v1297 = vmax.f32 %v1219, 0.0
      %v1298 = vmax.f32 %v1224, 0.0
      %v1299 = vmax.f32 %v1227, 0.0
      %v1300 = vmax.f32 %v1232, 0.0
      %v1301 = vmax.f32 %v1235, 0.0
      %v1302 = vld [vmem:[%s5] sm:$0x1]
      %v1304 = vlaneseq
      %v1305 = vshrl.u32 %v1304, 7
      %v1306 = vsub.s32 0, %v1305
      %v1307 = vrot.slane %v1302, %v1306
      %v1309 = vmul.f32 %v1238, %v1307
      %v1310 = vmul.f32 %v1239, %v1307
      %v1311 = vmul.f32 %v1240, %v1307
      %v1312 = vmul.f32 %v1241, %v1307
      %v1313 = vmul.f32 %v1242, %v1307
      %v1314 = vmul.f32 %v1243, %v1307
      %v1315 = vmul.f32 %v1244, %v1307
      %v1316 = vmul.f32 %v1245, %v1307
      %v1317 = vmul.f32 %v1246, %v1307
      %v1318 = vmul.f32 %v1247, %v1307
      %v1319 = vmul.f32 %v1248, %v1307
      %v1320 = vmul.f32 %v1249, %v1307
      %v1321 = vmul.f32 %v1250, %v1307
      %v1322 = vmul.f32 %v1251, %v1307
      %v1323 = vmul.f32 %v1252, %v1307
      %v1324 = vmul.f32 %v1253, %v1307
      %v1325 = vmul.f32 %v1254, %v1307
      %v1326 = vmul.f32 %v1255, %v1307
      %v1327 = vmul.f32 %v1256, %v1307
      %v1328 = vmul.f32 %v1257, %v1307
      %v1329 = vmul.f32 %v1258, %v1307
      %v1330 = vmul.f32 %v1259, %v1307
      %v1331 = vmul.f32 %v1260, %v1307
      %v1332 = vmul.f32 %v1261, %v1307
      %v1333 = vmul.f32 %v1262, %v1307
      %v1334 = vmul.f32 %v1263, %v1307
      %v1335 = vmul.f32 %v1264, %v1307
      %v1336 = vmul.f32 %v1265, %v1307
      %v1337 = vmul.f32 %v1266, %v1307
      %v1338 = vmul.f32 %v1267, %v1307
      %v1339 = vmul.f32 %v1268, %v1307
      %v1340 = vmul.f32 %v1269, %v1307
      %v1341 = vmul.f32 %v1270, %v1307
      %v1342 = vmul.f32 %v1271, %v1307
      %v1343 = vmul.f32 %v1272, %v1307
      %v1344 = vmul.f32 %v1273, %v1307
      %v1345 = vmul.f32 %v1274, %v1307
      %v1346 = vmul.f32 %v1275, %v1307
      %v1347 = vmul.f32 %v1276, %v1307
      %v1348 = vmul.f32 %v1277, %v1307
      %v1349 = vmul.f32 %v1278, %v1307
      %v1350 = vmul.f32 %v1279, %v1307
      %v1351 = vmul.f32 %v1280, %v1307
      %v1352 = vmul.f32 %v1281, %v1307
      %v1353 = vmul.f32 %v1282, %v1307
      %v1354 = vmul.f32 %v1283, %v1307
      %v1355 = vmul.f32 %v1284, %v1307
      %v1356 = vmul.f32 %v1285, %v1307
      %v1357 = vmul.f32 %v1286, %v1307
      %v1358 = vmul.f32 %v1287, %v1307
      %v1359 = vmul.f32 %v1288, %v1307
      %v1360 = vmul.f32 %v1289, %v1307
      %v1361 = vmul.f32 %v1290, %v1307
      %v1362 = vmul.f32 %v1291, %v1307
      %v1363 = vmul.f32 %v1292, %v1307
      %v1364 = vmul.f32 %v1293, %v1307
      %v1365 = vmul.f32 %v1294, %v1307
      %v1366 = vmul.f32 %v1295, %v1307
      %v1367 = vmul.f32 %v1296, %v1307
      %v1368 = vmul.f32 %v1297, %v1307
      %v1369 = vmul.f32 %v1298, %v1307
      %v1370 = vmul.f32 %v1299, %v1307
      %v1371 = vmul.f32 %v1300, %v1307
      %v1372 = vmul.f32 %v1301, %v1307
      %1373 = vadd.xlane.f32.xlu0 %v1309
      %v1374 = vpop.xlane.xlu0 %1373
      %1375 = vadd.xlane.f32.xlu0 %v1310
      %v1376 = vpop.xlane.xlu0 %1375
      %1377 = vadd.xlane.f32.xlu0 %v1311
      %v1378 = vpop.xlane.xlu0 %1377
      %1379 = vadd.xlane.f32.xlu0 %v1312
      %v1380 = vpop.xlane.xlu0 %1379
      %1381 = vadd.xlane.f32.xlu0 %v1313
      %v1382 = vpop.xlane.xlu0 %1381
      %1383 = vadd.xlane.f32.xlu0 %v1314
      %v1384 = vpop.xlane.xlu0 %1383
      %1385 = vadd.xlane.f32.xlu0 %v1315
      %v1386 = vpop.xlane.xlu0 %1385
      %1387 = vadd.xlane.f32.xlu0 %v1316
      %v1388 = vpop.xlane.xlu0 %1387
      %1389 = vadd.xlane.f32.xlu0 %v1317
      %v1390 = vpop.xlane.xlu0 %1389
      %1391 = vadd.xlane.f32.xlu0 %v1318
      %v1392 = vpop.xlane.xlu0 %1391
      %1393 = vadd.xlane.f32.xlu0 %v1319
      %v1394 = vpop.xlane.xlu0 %1393
      %1395 = vadd.xlane.f32.xlu0 %v1320
      %v1396 = vpop.xlane.xlu0 %1395
      %1397 = vadd.xlane.f32.xlu0 %v1321
      %v1398 = vpop.xlane.xlu0 %1397
      %1399 = vadd.xlane.f32.xlu0 %v1322
      %v1400 = vpop.xlane.xlu0 %1399
      %1401 = vadd.xlane.f32.xlu0 %v1323
      %v1402 = vpop.xlane.xlu0 %1401
      %1403 = vadd.xlane.f32.xlu0 %v1324
      %v1404 = vpop.xlane.xlu0 %1403
      %1405 = vadd.xlane.f32.xlu0 %v1325
      %v1406 = vpop.xlane.xlu0 %1405
      %1407 = vadd.xlane.f32.xlu0 %v1326
      %v1408 = vpop.xlane.xlu0 %1407
      %1409 = vadd.xlane.f32.xlu0 %v1327
      %v1410 = vpop.xlane.xlu0 %1409
      %1411 = vadd.xlane.f32.xlu0 %v1328
      %v1412 = vpop.xlane.xlu0 %1411
      %1413 = vadd.xlane.f32.xlu0 %v1329
      %v1414 = vpop.xlane.xlu0 %1413
      %1415 = vadd.xlane.f32.xlu0 %v1330
      %v1416 = vpop.xlane.xlu0 %1415
      %1417 = vadd.xlane.f32.xlu0 %v1331
      %v1418 = vpop.xlane.xlu0 %1417
      %1419 = vadd.xlane.f32.xlu0 %v1332
      %v1420 = vpop.xlane.xlu0 %1419
      %1421 = vadd.xlane.f32.xlu0 %v1333
      %v1422 = vpop.xlane.xlu0 %1421
      %1423 = vadd.xlane.f32.xlu0 %v1334
      %v1424 = vpop.xlane.xlu0 %1423
      %1425 = vadd.xlane.f32.xlu0 %v1335
      %v1426 = vpop.xlane.xlu0 %1425
      %1427 = vadd.xlane.f32.xlu0 %v1336
      %v1428 = vpop.xlane.xlu0 %1427
      %1429 = vadd.xlane.f32.xlu0 %v1337
      %v1430 = vpop.xlane.xlu0 %1429
      %1431 = vadd.xlane.f32.xlu0 %v1338
      %v1432 = vpop.xlane.xlu0 %1431
      %1433 = vadd.xlane.f32.xlu0 %v1339
      %v1434 = vpop.xlane.xlu0 %1433
      %1435 = vadd.xlane.f32.xlu0 %v1340
      %v1436 = vpop.xlane.xlu0 %1435
      %1437 = vadd.xlane.f32.xlu0 %v1341
      %v1438 = vpop.xlane.xlu0 %1437
      %1439 = vadd.xlane.f32.xlu0 %v1342
      %v1440 = vpop.xlane.xlu0 %1439
      %1441 = vadd.xlane.f32.xlu0 %v1343
      %v1442 = vpop.xlane.xlu0 %1441
      %1443 = vadd.xlane.f32.xlu0 %v1344
      %v1444 = vpop.xlane.xlu0 %1443
      %1445 = vadd.xlane.f32.xlu0 %v1345
      %v1446 = vpop.xlane.xlu0 %1445
      %1447 = vadd.xlane.f32.xlu0 %v1346
      %v1448 = vpop.xlane.xlu0 %1447
      %1449 = vadd.xlane.f32.xlu0 %v1347
      %v1450 = vpop.xlane.xlu0 %1449
      %1451 = vadd.xlane.f32.xlu0 %v1348
      %v1452 = vpop.xlane.xlu0 %1451
      %1453 = vadd.xlane.f32.xlu0 %v1349
      %v1454 = vpop.xlane.xlu0 %1453
      %1455 = vadd.xlane.f32.xlu0 %v1350
      %v1456 = vpop.xlane.xlu0 %1455
      %1457 = vadd.xlane.f32.xlu0 %v1351
      %v1458 = vpop.xlane.xlu0 %1457
      %1459 = vadd.xlane.f32.xlu0 %v1352
      %v1460 = vpop.xlane.xlu0 %1459
      %1461 = vadd.xlane.f32.xlu0 %v1353
      %v1462 = vpop.xlane.xlu0 %1461
      %1463 = vadd.xlane.f32.xlu0 %v1354
      %v1464 = vpop.xlane.xlu0 %1463
      %1465 = vadd.xlane.f32.xlu0 %v1355
      %v1466 = vpop.xlane.xlu0 %1465
      %1467 = vadd.xlane.f32.xlu0 %v1356
      %v1468 = vpop.xlane.xlu0 %1467
      %1469 = vadd.xlane.f32.xlu0 %v1357
      %v1470 = vpop.xlane.xlu0 %1469
      %1471 = vadd.xlane.f32.xlu0 %v1358
      %v1472 = vpop.xlane.xlu0 %1471
      %1473 = vadd.xlane.f32.xlu0 %v1359
      %v1474 = vpop.xlane.xlu0 %1473
      %1475 = vadd.xlane.f32.xlu0 %v1360
      %v1476 = vpop.xlane.xlu0 %1475
      %1477 = vadd.xlane.f32.xlu0 %v1361
      %v1478 = vpop.xlane.xlu0 %1477
      %1479 = vadd.xlane.f32.xlu0 %v1362
      %v1480 = vpop.xlane.xlu0 %1479
      %1481 = vadd.xlane.f32.xlu0 %v1363
      %v1482 = vpop.xlane.xlu0 %1481
      %1483 = vadd.xlane.f32.xlu0 %v1364
      %v1484 = vpop.xlane.xlu0 %1483
      %1485 = vadd.xlane.f32.xlu0 %v1365
      %v1486 = vpop.xlane.xlu0 %1485
      %1487 = vadd.xlane.f32.xlu0 %v1366
      %v1488 = vpop.xlane.xlu0 %1487
      %1489 = vadd.xlane.f32.xlu0 %v1367
      %v1490 = vpop.xlane.xlu0 %1489
      %1491 = vadd.xlane.f32.xlu0 %v1368
      %v1492 = vpop.xlane.xlu0 %1491
      %1493 = vadd.xlane.f32.xlu0 %v1369
      %v1494 = vpop.xlane.xlu0 %1493
      %1495 = vadd.xlane.f32.xlu0 %v1370
      %v1496 = vpop.xlane.xlu0 %1495
      %1497 = vadd.xlane.f32.xlu0 %v1371
      %v1498 = vpop.xlane.xlu0 %1497
      %1499 = vadd.xlane.f32.xlu0 %v1372
      %v1500 = vpop.xlane.xlu0 %1499
      %v1501 = vld [vmem:[#allocation2] sm:$0x1]
      %v1503 = vlaneseq
      %v1504 = vshrl.u32 %v1503, 7
      %v1505 = vsub.s32 0, %v1504
      %v1506 = vrot.slane %v1501, %v1505
      %v1508 = vadd.f32 %v1374, %v1506
      %v1509 = vadd.f32 %v1376, %v1506
      %v1510 = vadd.f32 %v1378, %v1506
      %v1511 = vadd.f32 %v1380, %v1506
      %v1512 = vadd.f32 %v1382, %v1506
      %v1513 = vadd.f32 %v1384, %v1506
      %v1514 = vadd.f32 %v1386, %v1506
      %v1515 = vadd.f32 %v1388, %v1506
      %v1516 = vadd.f32 %v1390, %v1506
      %v1517 = vadd.f32 %v1392, %v1506
      %v1518 = vadd.f32 %v1394, %v1506
      %v1519 = vadd.f32 %v1396, %v1506
      %v1520 = vadd.f32 %v1398, %v1506
      %v1521 = vadd.f32 %v1400, %v1506
      %v1522 = vadd.f32 %v1402, %v1506
      %v1523 = vadd.f32 %v1404, %v1506
      %v1524 = vadd.f32 %v1406, %v1506
      %v1525 = vadd.f32 %v1408, %v1506
      %v1526 = vadd.f32 %v1410, %v1506
      %v1527 = vadd.f32 %v1412, %v1506
      %v1528 = vadd.f32 %v1414, %v1506
      %v1529 = vadd.f32 %v1416, %v1506
      %v1530 = vadd.f32 %v1418, %v1506
      %v1531 = vadd.f32 %v1420, %v1506
      %v1532 = vadd.f32 %v1422, %v1506
      %v1533 = vadd.f32 %v1424, %v1506
      %v1534 = vadd.f32 %v1426, %v1506
      %v1535 = vadd.f32 %v1428, %v1506
      %v1536 = vadd.f32 %v1430, %v1506
      %v1537 = vadd.f32 %v1432, %v1506
      %v1538 = vadd.f32 %v1434, %v1506
      %v1539 = vadd.f32 %v1436, %v1506
      %v1540 = vadd.f32 %v1438, %v1506
      %v1541 = vadd.f32 %v1440, %v1506
      %v1542 = vadd.f32 %v1442, %v1506
      %v1543 = vadd.f32 %v1444, %v1506
      %v1544 = vadd.f32 %v1446, %v1506
      %v1545 = vadd.f32 %v1448, %v1506
      %v1546 = vadd.f32 %v1450, %v1506
      %v1547 = vadd.f32 %v1452, %v1506
      %v1548 = vadd.f32 %v1454, %v1506
      %v1549 = vadd.f32 %v1456, %v1506
      %v1550 = vadd.f32 %v1458, %v1506
      %v1551 = vadd.f32 %v1460, %v1506
      %v1552 = vadd.f32 %v1462, %v1506
      %v1553 = vadd.f32 %v1464, %v1506
      %v1554 = vadd.f32 %v1466, %v1506
      %v1555 = vadd.f32 %v1468, %v1506
      %v1556 = vadd.f32 %v1470, %v1506
      %v1557 = vadd.f32 %v1472, %v1506
      %v1558 = vadd.f32 %v1474, %v1506
      %v1559 = vadd.f32 %v1476, %v1506
      %v1560 = vadd.f32 %v1478, %v1506
      %v1561 = vadd.f32 %v1480, %v1506
      %v1562 = vadd.f32 %v1482, %v1506
      %v1563 = vadd.f32 %v1484, %v1506
      %v1564 = vadd.f32 %v1486, %v1506
      %v1565 = vadd.f32 %v1488, %v1506
      %v1566 = vadd.f32 %v1490, %v1506
      %v1567 = vadd.f32 %v1492, %v1506
      %v1568 = vadd.f32 %v1494, %v1506
      %v1569 = vadd.f32 %v1496, %v1506
      %v1570 = vadd.f32 %v1498, %v1506
      %v1571 = vadd.f32 %v1500, %v1506
      %vm1572 = vcmask 7168
      %1573 = vst.msk [vmem:[%s282] sm:$0xff] %vm1572, %v1508
      %1574 = vst.msk [vmem:[%s282 + $0x8] sm:$0xff] %vm1572, %v1509
      %1575 = vst.msk [vmem:[%s282 + $0x10] sm:$0xff] %vm1572, %v1510
      %1576 = vst.msk [vmem:[%s282 + $0x18] sm:$0xff] %vm1572, %v1511
      %1577 = vst.msk [vmem:[%s282 + $0x20] sm:$0xff] %vm1572, %v1512
      %1578 = vst.msk [vmem:[%s282 + $0x28] sm:$0xff] %vm1572, %v1513
      %1579 = vst.msk [vmem:[%s282 + $0x30] sm:$0xff] %vm1572, %v1514
      %1580 = vst.msk [vmem:[%s282 + $0x38] sm:$0xff] %vm1572, %v1515
      %1581 = vst.msk [vmem:[%s282 + $0x40] sm:$0xff] %vm1572, %v1516
      %1582 = vst.msk [vmem:[%s282 + $0x48] sm:$0xff] %vm1572, %v1517
      %1583 = vst.msk [vmem:[%s282 + $0x50] sm:$0xff] %vm1572, %v1518
      %1584 = vst.msk [vmem:[%s282 + $0x58] sm:$0xff] %vm1572, %v1519
      %1585 = vst.msk [vmem:[%s282 + $0x60] sm:$0xff] %vm1572, %v1520
      %1586 = vst.msk [vmem:[%s282 + $0x68] sm:$0xff] %vm1572, %v1521
      %1587 = vst.msk [vmem:[%s282 + $0x70] sm:$0xff] %vm1572, %v1522
      %1588 = vst.msk [vmem:[%s282 + $0x78] sm:$0xff] %vm1572, %v1523
      %1589 = vst.msk [vmem:[%s282 + $0x80] sm:$0xff] %vm1572, %v1524
      %1590 = vst.msk [vmem:[%s282 + $0x88] sm:$0xff] %vm1572, %v1525
      %1591 = vst.msk [vmem:[%s282 + $0x90] sm:$0xff] %vm1572, %v1526
      %1592 = vst.msk [vmem:[%s282 + $0x98] sm:$0xff] %vm1572, %v1527
      %1593 = vst.msk [vmem:[%s282 + $0xa0] sm:$0xff] %vm1572, %v1528
      %1594 = vst.msk [vmem:[%s282 + $0xa8] sm:$0xff] %vm1572, %v1529
      %1595 = vst.msk [vmem:[%s282 + $0xb0] sm:$0xff] %vm1572, %v1530
      %1596 = vst.msk [vmem:[%s282 + $0xb8] sm:$0xff] %vm1572, %v1531
      %1597 = vst.msk [vmem:[%s282 + $0xc0] sm:$0xff] %vm1572, %v1532
      %1598 = vst.msk [vmem:[%s282 + $0xc8] sm:$0xff] %vm1572, %v1533
      %1599 = vst.msk [vmem:[%s282 + $0xd0] sm:$0xff] %vm1572, %v1534
      %1600 = vst.msk [vmem:[%s282 + $0xd8] sm:$0xff] %vm1572, %v1535
      %1601 = vst.msk [vmem:[%s282 + $0xe0] sm:$0xff] %vm1572, %v1536
      %1602 = vst.msk [vmem:[%s282 + $0xe8] sm:$0xff] %vm1572, %v1537
      %1603 = vst.msk [vmem:[%s282 + $0xf0] sm:$0xff] %vm1572, %v1538
      %1604 = vst.msk [vmem:[%s282 + $0xf8] sm:$0xff] %vm1572, %v1539
      %1605 = vst.msk [vmem:[%s282 + $0x100] sm:$0xff] %vm1572, %v1540
      %1606 = vst.msk [vmem:[%s282 + $0x108] sm:$0xff] %vm1572, %v1541
      %1607 = vst.msk [vmem:[%s282 + $0x110] sm:$0xff] %vm1572, %v1542
      %1608 = vst.msk [vmem:[%s282 + $0x118] sm:$0xff] %vm1572, %v1543
      %1609 = vst.msk [vmem:[%s282 + $0x120] sm:$0xff] %vm1572, %v1544
      %1610 = vst.msk [vmem:[%s282 + $0x128] sm:$0xff] %vm1572, %v1545
      %1611 = vst.msk [vmem:[%s282 + $0x130] sm:$0xff] %vm1572, %v1546
      %1612 = vst.msk [vmem:[%s282 + $0x138] sm:$0xff] %vm1572, %v1547
      %1613 = vst.msk [vmem:[%s282 + $0x140] sm:$0xff] %vm1572, %v1548
      %1614 = vst.msk [vmem:[%s282 + $0x148] sm:$0xff] %vm1572, %v1549
      %1615 = vst.msk [vmem:[%s282 + $0x150] sm:$0xff] %vm1572, %v1550
      %1616 = vst.msk [vmem:[%s282 + $0x158] sm:$0xff] %vm1572, %v1551
      %1617 = vst.msk [vmem:[%s282 + $0x160] sm:$0xff] %vm1572, %v1552
      %1618 = vst.msk [vmem:[%s282 + $0x168] sm:$0xff] %vm1572, %v1553
      %1619 = vst.msk [vmem:[%s282 + $0x170] sm:$0xff] %vm1572, %v1554
      %1620 = vst.msk [vmem:[%s282 + $0x178] sm:$0xff] %vm1572, %v1555
      %1621 = vst.msk [vmem:[%s282 + $0x180] sm:$0xff] %vm1572, %v1556
      %1622 = vst.msk [vmem:[%s282 + $0x188] sm:$0xff] %vm1572, %v1557
      %1623 = vst.msk [vmem:[%s282 + $0x190] sm:$0xff] %vm1572, %v1558
      %1624 = vst.msk [vmem:[%s282 + $0x198] sm:$0xff] %vm1572, %v1559
      %1625 = vst.msk [vmem:[%s282 + $0x1a0] sm:$0xff] %vm1572, %v1560
      %1626 = vst.msk [vmem:[%s282 + $0x1a8] sm:$0xff] %vm1572, %v1561
      %1627 = vst.msk [vmem:[%s282 + $0x1b0] sm:$0xff] %vm1572, %v1562
      %1628 = vst.msk [vmem:[%s282 + $0x1b8] sm:$0xff] %vm1572, %v1563
      %1629 = vst.msk [vmem:[%s282 + $0x1c0] sm:$0xff] %vm1572, %v1564
      %1630 = vst.msk [vmem:[%s282 + $0x1c8] sm:$0xff] %vm1572, %v1565
      %1631 = vst.msk [vmem:[%s282 + $0x1d0] sm:$0xff] %vm1572, %v1566
      %1632 = vst.msk [vmem:[%s282 + $0x1d8] sm:$0xff] %vm1572, %v1567
      %1633 = vst.msk [vmem:[%s282 + $0x1e0] sm:$0xff] %vm1572, %v1568
      %1634 = vst.msk [vmem:[%s282 + $0x1e8] sm:$0xff] %vm1572, %v1569
      %1635 = vst.msk [vmem:[%s282 + $0x1f0] sm:$0xff] %vm1572, %v1570
      %1636 = vst.msk [vmem:[%s282 + $0x1f8] sm:$0xff] %vm1572, %v1571
      %s1637 = smul.u32 64, %s20
      %p1638 = scmp.lt.s32.totalorder %s1637, 127
      %s1639 = scalar_select %p1638, %s1637, 127
      %s1640 = smul.addr %s1639, 8
      %s1641 = scalar_lea.vmem %s7, %s1640
      // Predicated region
      $region49: #{critic_net_forward.1} parent=47 // pred_check
        %p1642 = pneg %p190
      $region50: #{critic_net_forward.1} parent=47 // pred_check_branch
        %1644 = sbr.rel (%p1642) target = $region52
      $region51: #{critic_net_forward.1} parent=47 // pred_region
        %s1645 = smul.u32 64, %s20
      $region52: #{critic_net_forward.1} parent=47 // pred_fallthru
        _
    $region48: #{critic_net_forward.1} parent=5 // pred_fallthru
      _
    %p1646 = scmp.le.s32.totalorder 2, %s15
    // Predicated region
    $region53: #{critic_net_forward.1} parent=5 // pred_check
      %p1647 = pneg %p1646
    $region54: #{critic_net_forward.1} parent=5 // pred_check_branch
      %1649 = sbr.rel (%p1647) target = $region56
    $region55: #{critic_net_forward.1} parent=5 // pred_region
      %s1650 = ssub.s32 %s15, 2
      // Predicated region
      $region57: #{critic_net_forward.1} parent=55 // pred_check
        %p1651 = pneg %p196
      $region58: #{critic_net_forward.1} parent=55 // pred_check_branch
        %1653 = sbr.rel (%p1651) target = $region60
      $region59: #{critic_net_forward.1} parent=55 // pred_region
        %s1654 = smul.u32 64, %s21
        %p1655 = scmp.lt.s32.totalorder %s1654, 127
        %s1656 = scalar_select %p1655, %s1654, 127
        %s1657 = smul.addr %s1656, 8
        %s1658 = scalar_lea.vmem %s7, %s1657
      $region60: #{critic_net_forward.1} parent=55 // pred_fallthru
        _
    $region56: #{critic_net_forward.1} parent=5 // pred_fallthru
      _
  $region6: #{critic_net_forward.1} parent=0 // loop_footer
    %s19 = sadd.s32 1, %s15
  $region7: #{critic_net_forward.1} parent=0 // loop_footer_branch
    %14 = sbr.rel target = $region3
  $region8: #{critic_net_forward.1} parent=0 // loop_exit
    _

</llo_original>
